<compile_context>
chip_gen: v7x
topology: tpu7x:2x2x1
jax: 0.10.0
libtpu: 0.0.40
codegen_flags: <defaults>
</compile_context>

<pallas_src>
import math
import functools

import jax
import jax.numpy as jnp
from jax.experimental import pallas as pl
from jax.experimental.pallas import tpu as pltpu

_LN_EPS = 1e-5


def _layernorm(x, gamma, beta, eps=_LN_EPS):
    mu = jnp.mean(x, axis=-1, keepdims=True)
    var = jnp.mean((x - mu) ** 2, axis=-1, keepdims=True)
    return (x - mu) * jax.lax.rsqrt(var + eps) * gamma + beta


# ------------------------- kernel 1: LN1 + fused QKV projection -------------------------
def ln_qkv_kernel(x_ref, ln1_g_ref, ln1_b_ref, wqkv_ref, bqkv_ref,
                  q_ref, k_ref, v_ref, *, n_head):
    x = x_ref[0].astype(jnp.float32)                       # (tq, C)
    C = x.shape[-1]
    hd = C // n_head
    scale = 1.0 / math.sqrt(hd)

    h = _layernorm(x, ln1_g_ref[0], ln1_b_ref[0])          # f32
    # One fused GEMM instead of three (C,C) matmuls; bf16 operands, f32 accumulation.
    qkv = jnp.dot(h.astype(jnp.bfloat16), wqkv_ref[...],
                  preferred_element_type=jnp.float32) + bqkv_ref[0]   # (tq, 3C) f32

    # Pre-scale q in f32 (score scaling fused here, not on the (H,tq,Tk) matrix).
    qpart = qkv[:, :C] * scale

    # Head-major stores: q/k/v go out as (B, H, T, hd) directly, so kernel 2 needs
    # no wrapper-side reshape+transpose (saves a full HBM round trip of QKV).
    # With hd < 128 these are lane-sliced stores, still far cheaper than that traffic.
    for hh in range(n_head):
        lo = hh * hd
        q_ref[0, hh] = qpart[:, lo:lo + hd].astype(q_ref.dtype)
        k_ref[0, hh] = qkv[:, C + lo:C + lo + hd].astype(k_ref.dtype)
        v_ref[0, hh] = qkv[:, 2 * C + lo:2 * C + lo + hd].astype(v_ref.dtype)


# -------- kernel 2: attention + projection + residual + LN2 + MLP + residual --------
def attn_mlp_kernel(x_ref, q_ref, k_ref, v_ref,
                    wp_ref, bp_ref, ln2_g_ref, ln2_b_ref,
                    w1_ref, b1_ref, w2_ref, b2_ref,
                    o_ref, *, n_head, fused_proj):
    x = x_ref[0].astype(jnp.float32)                       # (tq, C) residual stream, f32
    q3 = q_ref[0]                                          # (H, tq, hd) bf16 (pre-scaled)
    k3 = k_ref[0]                                          # (H, Tk, hd) bf16
    v3 = v_ref[0]                                          # (H, Tk, hd) bf16
    C = x.shape[-1]
    hd = C // n_head

    # Scores for all heads at once (leading batch dim over heads -> no k transpose).
    s = jax.lax.dot_general(q3, k3, (((2,), (2,)), ((0,), (0,))),
                            preferred_element_type=jnp.float32)       # (H, tq, Tk) f32

    # Softmax fully in f32 (v5e has no bf16 VPU/EUP); approx reciprocal uses the EUP slot.
    s = s - jnp.max(s, axis=-1, keepdims=True)
    p = jnp.exp(s)
    p = p * pl.reciprocal(jnp.sum(p, axis=-1, keepdims=True), approx=True)

    # Per-head attention output, batched over heads.
    y3 = jax.lax.dot_general(p.astype(jnp.bfloat16), v3,
                             (((2,), (1,)), ((0,), (0,))),
                             preferred_element_type=jnp.float32)      # (H, tq, hd) f32

    if fused_proj:
        # Assemble heads along lanes (cheap VPU/XLU work) and run ONE projection
        # matmul with full contraction depth K=C instead of n_head hd-deep matmuls.
        if n_head == 1:
            y2 = y3[0]
        else:
            y2 = jnp.concatenate([y3[hh] for hh in range(n_head)], axis=-1)  # (tq, C)
        attn = jnp.dot(y2.astype(jnp.bfloat16), wp_ref[...],
                       preferred_element_type=jnp.float32)
    else:
        # Fallback: per-head accumulation against row-slices of the (C, C) weight.
        attn = jnp.dot(y3[0].astype(jnp.bfloat16), wp_ref[:hd, :],
                       preferred_element_type=jnp.float32)
        for hh in range(1, n_head):
            attn = attn + jnp.dot(y3[hh].astype(jnp.bfloat16),
                                  wp_ref[hh * hd:(hh + 1) * hd, :],
                                  preferred_element_type=jnp.float32)

    x = x + attn + bp_ref[0]                               # residual 1

    # ---------------- MLP branch ----------------
    h2 = _layernorm(x, ln2_g_ref[0], ln2_b_ref[0])
    m = jnp.dot(h2.astype(jnp.bfloat16), w1_ref[...],
                preferred_element_type=jnp.float32) + b1_ref[0]
    m = jax.nn.gelu(m, approximate=False)                  # exact erf GELU == nn.GELU()
    m = jnp.dot(m.astype(jnp.bfloat16), w2_ref[...],
                preferred_element_type=jnp.float32) + b2_ref[0]

    o_ref[0] = (x + m).astype(o_ref.dtype)                 # residual 2


# ----------------------------------- wrapper -----------------------------------
def _hw_defaults():
    """(vmem_limit_bytes, query-tile target) per TPU generation."""
    kind = ""
    try:
        kind = jax.devices()[0].device_kind.lower()
    except Exception:
        pass
    if ("v5" in kind) or ("v6" in kind):
        # 128 MiB physical VMEM: bigger scoped budget + bigger query tiles.
        return 96 * 1024 * 1024, 256
    # v7x (64 MiB/TC) or unknown: conservative budget, smaller tiles.
    return 48 * 1024 * 1024, 128


def _pick_query_tile(T, target):
    if T <= target:
        return T
    for cand in range(min(target, T), 15, -1):
        if T % cand == 0 and cand % 16 == 0:
            return cand
    return T


def _block_impl(x, params, *, n_head, block_q, single_buffer_consts, fused_proj):
    B, T, C = x.shape
    assert C % n_head == 0
    hd = C // n_head
    (ln1_g, ln1_b, wq, bq, wk, bk, wv, bv, wp, bp,
     ln2_g, ln2_b, w1, b1, w2, b2) = params

    # Fold q/k/v into one GEMM; matmul weights in bf16 (f32 accumulation in-kernel).
    wqkv = jnp.concatenate([wq, wk, wv], axis=1).astype(jnp.bfloat16)   # (C, 3C)
    bqkv = jnp.concatenate([bq, bk, bv], axis=1)                        # (1, 3C) f32
    wpb = wp.astype(jnp.bfloat16)                                       # (C, C)
    w1b = w1.astype(jnp.bfloat16)
    w2b = w2.astype(jnp.bfloat16)

    vmem_limit, q_target = _hw_defaults()
    if block_q is None:
        tq = _pick_query_tile(T, q_target)        # real default instead of tq=T
    else:
        tq = min(block_q, T)
    assert T % tq == 0, "T must be divisible by the query tile"
    assert tq == T or tq % 16 == 0, "query tile must be a multiple of 16 (bf16 sublanes)"

    def const_spec(shape):
        # Constant-index full-array block (weights / biases / LN params).
        # Single-buffer them: the block never changes, so 2-deep pipelining
        # only doubles their VMEM footprint.
        idx = lambda b, i, _nd=len(shape): (0,) * _nd
        if single_buffer_consts:
            return pl.BlockSpec(shape, idx, pipeline_mode=pl.Buffered(1))
        return pl.BlockSpec(shape, idx)

    row_spec = pl.BlockSpec((1, tq, C), lambda b, i: (b, i, 0))
    headq_spec = pl.BlockSpec((1, n_head, tq, hd), lambda b, i: (b, 0, i, 0))
    # K/V block only changes with the (outer) batch axis; keep default 2-deep
    # buffering so the next batch's K/V prefetches behind the last query tile.
    headkv_spec = pl.BlockSpec((1, n_head, T, hd), lambda b, i: (b, 0, 0, 0))

    cparams = pltpu.CompilerParams(
        dimension_semantics=("parallel", "parallel"),   # megacore-shardable grid
        vmem_limit_bytes=vmem_limit)

    # ---- kernel 1: LN1 + fused QKV, writes q/k/v head-major (B, H, T, hd) ----
    q, k, v = pl.pallas_call(
        functools.partial(ln_qkv_kernel, n_head=n_head),
        out_shape=[jax.ShapeDtypeStruct((B, n_head, T, hd), jnp.bfloat16)] * 3,
        grid_spec=pltpu.PrefetchScalarGridSpec(
            num_scalar_prefetch=0,
            grid=(B, T // tq),
            in_specs=[row_spec,
                      const_spec((1, C)), const_spec((1, C)),
                      const_spec((C, 3 * C)), const_spec((1, 3 * C))],
            out_specs=[headq_spec, headq_spec, headq_spec]),
        compiler_params=cparams,
    )(x, ln1_g, ln1_b, wqkv, bqkv)

    # ---- kernel 2: attention + proj + residual + LN2 + MLP + residual ----
    out = pl.pallas_call(
        functools.partial(attn_mlp_kernel, n_head=n_head, fused_proj=fused_proj),
        out_shape=jax.ShapeDtypeStruct((B, T, C), x.dtype),
        grid_spec=pltpu.PrefetchScalarGridSpec(
            num_scalar_prefetch=0,
            grid=(B, T // tq),
            in_specs=[row_spec, headq_spec, headkv_spec, headkv_spec,
                      const_spec((C, C)), const_spec((1, C)),
                      const_spec((1, C)), const_spec((1, C)),
                      const_spec((C, 2 * C)), const_spec((1, 2 * C)),
                      const_spec((2 * C, C)), const_spec((1, C))],
            out_specs=row_spec),
        compiler_params=cparams,
    )(x, q, k, v, wpb, bp, ln2_g, ln2_b, w1b, b1, w2b, b2)
    return out


def transformer_block(x, params, *, n_head, block_q=None):
    """x: (B, T, C) f32.  params as produced by init_params (weights stored (in, out))."""
    try:
        return _block_impl(x, params, n_head=n_head, block_q=block_q,
                           single_buffer_consts=True, fused_proj=True)
    except Exception:
        # Fallback for Pallas/Mosaic builds without Buffered(1) pipeline_mode or
        # unaligned lane concatenation: default-buffered constants + per-head
        # accumulated projection (previously validated path).
        return _block_impl(x, params, n_head=n_head, block_q=block_q,
                           single_buffer_consts=False, fused_proj=False)


def init_params(key, n_embd):
    ks = jax.random.split(key, 8)
    C = n_embd
    s = 0.02
    # weights stored as (in, out); biases as (1, out) for 2-D VMEM tiles
    wq = s * jax.random.normal(ks[0], (C, C), jnp.float32)
    wk = s * jax.random.normal(ks[1], (C, C), jnp.float32)
    wv = s * jax.random.normal(ks[2], (C, C), jnp.float32)
    wp = s * jax.random.normal(ks[3], (C, C), jnp.float32)
    w1 = s * jax.random.normal(ks[4], (C, 2 * C), jnp.float32)
    w2 = s * jax.random.normal(ks[5], (2 * C, C), jnp.float32)
    bq = 0.01 * jax.random.normal(ks[6], (1, C), jnp.float32)
    bk = jnp.zeros((1, C), jnp.float32)
    bv = jnp.zeros((1, C), jnp.float32)
    bp = jnp.zeros((1, C), jnp.float32)
    b1 = 0.01 * jax.random.normal(ks[7], (1, 2 * C), jnp.float32)
    b2 = jnp.zeros((1, C), jnp.float32)
    ln1_g = jnp.ones((1, C), jnp.float32)
    ln1_b = jnp.zeros((1, C), jnp.float32)
    ln2_g = jnp.ones((1, C), jnp.float32)
    ln2_b = jnp.zeros((1, C), jnp.float32)
    return (ln1_g, ln1_b, wq, bq, wk, bk, wv, bv, wp, bp,
            ln2_g, ln2_b, w1, b1, w2, b2)


def reference_block(x, params, *, n_head):
    """Pure-JAX f32 reference (mirrors the PyTorch forward in eval mode)."""
    (ln1_g, ln1_b, wq, bq, wk, bk, wv, bv, wp, bp,
     ln2_g, ln2_b, w1, b1, w2, b2) = params
    B, T, C = x.shape
    hd = C // n_head

    def ln(v, g, b):
        mu = jnp.mean(v, -1, keepdims=True)
        var = jnp.mean((v - mu) ** 2, -1, keepdims=True)
        return (v - mu) / jnp.sqrt(var + _LN_EPS) * g + b

    h = ln(x, ln1_g[0], ln1_b[0])
    q = (h @ wq + bq[0]).reshape(B, T, n_head, hd).transpose(0, 2, 1, 3)
    k = (h @ wk + bk[0]).reshape(B, T, n_head, hd).transpose(0, 2, 1, 3)
    v = (h @ wv + bv[0]).reshape(B, T, n_head, hd).transpose(0, 2, 1, 3)
    att = jax.nn.softmax(q @ jnp.swapaxes(k, -2, -1) / math.sqrt(hd), axis=-1)
    y = (att @ v).transpose(0, 2, 1, 3).reshape(B, T, C)
    x = x + (y @ wp + bp[0])
    h2 = ln(x, ln2_g[0], ln2_b[0])
    m = jax.nn.gelu(h2 @ w1 + b1[0], approximate=False) @ w2 + b2[0]
    return x + m


if __name__ == "__main__":
    def run_case(B, T, C, n_head, block_q):
        key = jax.random.PRNGKey(0)
        kx, kp = jax.random.split(key)
        x = jax.random.normal(kx, (B, T, C), jnp.float32)
        params = init_params(kp, C)

        out = transformer_block(x, params, n_head=n_head, block_q=block_q)
        out = jax.block_until_ready(out)

        ref = reference_block(x, params, n_head=n_head)
        assert out.shape == (B, T, C)
        # Tolerance reflects the deliberate bf16-operand / f32-accumulation trade.
        err = float(jnp.max(jnp.abs(out - ref)))
        assert jnp.allclose(out, ref, atol=2e-2, rtol=2e-2), f"mismatch vs reference: {err}"

    # Tiny shapes implied by the module spec (default-tile path).
    run_case(B=2, T=8, C=32, n_head=4, block_q=None)
    # Larger case exercising the multi-tile (query-tiled) grid path.
    run_case(B=2, T=128, C=128, n_head=2, block_q=64)

    print("KERNEL_OK")
</pallas_src>

<mosaic_0001>
module attributes {stable_mosaic.version = 11 : i64} {
  func.func @ln_qkv_kernel(%arg0: i32, %arg1: i32, %arg2: memref<1x8x32xf32, #tpu.memory_space<vmem>>, %arg3: memref<1x32xf32, #tpu.memory_space<vmem>>, %arg4: memref<1x32xf32, #tpu.memory_space<vmem>>, %arg5: memref<32x96xbf16, #tpu.memory_space<vmem>>, %arg6: memref<1x96xf32, #tpu.memory_space<vmem>>, %arg7: memref<1x4x8x8xbf16, #tpu.memory_space<vmem>>, %arg8: memref<1x4x8x8xbf16, #tpu.memory_space<vmem>>, %arg9: memref<1x4x8x8xbf16, #tpu.memory_space<vmem>>) attributes {dimension_semantics = [#tpu.dimension_semantics<parallel>, #tpu.dimension_semantics<parallel>], iteration_bounds = array<i64: 2, 1>, scalar_prefetch = 0 : i64, scratch_operands = 0 : i64, tpu.core_type = #tpu.core_type<tc>, window_params = [{transform_indices = @transform_0, window_bounds = array<i64: 1, 8, 32>}, {pipeline_mode = #tpu.pipeline_mode<synchronous>, transform_indices = @transform_1, window_bounds = array<i64: 1, 32>}, {pipeline_mode = #tpu.pipeline_mode<synchronous>, transform_indices = @transform_2, window_bounds = array<i64: 1, 32>}, {pipeline_mode = #tpu.pipeline_mode<synchronous>, transform_indices = @transform_3, window_bounds = array<i64: 32, 96>}, {pipeline_mode = #tpu.pipeline_mode<synchronous>, transform_indices = @transform_4, window_bounds = array<i64: 1, 96>}, {transform_indices = @transform_5, window_bounds = array<i64: 1, 4, 8, 8>}, {transform_indices = @transform_6, window_bounds = array<i64: 1, 4, 8, 8>}, {transform_indices = @transform_7, window_bounds = array<i64: 1, 4, 8, 8>}]} {
    %c0 = arith.constant 0 : index
    %c0_0 = arith.constant 0 : index
    %c0_1 = arith.constant 0 : index
    %0 = vector.load %arg2[%c0, %c0_0, %c0_1] : memref<1x8x32xf32, #tpu.memory_space<vmem>>, vector<1x8x32xf32>
    %1 = vector.shape_cast %0 : vector<1x8x32xf32> to vector<8x32xf32>
    %c0_2 = arith.constant 0 : index
    %c0_3 = arith.constant 0 : index
    %2 = vector.load %arg3[%c0_2, %c0_3] : memref<1x32xf32, #tpu.memory_space<vmem>>, vector<1x32xf32>
    %3 = vector.shape_cast %2 : vector<1x32xf32> to vector<32xf32>
    %c0_4 = arith.constant 0 : index
    %c0_5 = arith.constant 0 : index
    %4 = vector.load %arg4[%c0_4, %c0_5] : memref<1x32xf32, #tpu.memory_space<vmem>>, vector<1x32xf32>
    %5 = vector.shape_cast %4 : vector<1x32xf32> to vector<32xf32>
    %cst = arith.constant dense<0.000000e+00> : vector<8xf32>
    %6 = vector.multi_reduction <add>, %1, %cst [1] : vector<8x32xf32> to vector<8xf32>
    %7 = vector.shape_cast %6 : vector<8xf32> to vector<8x1xf32>
    %cst_6 = arith.constant 3.200000e+01 : f32
    %8 = vector.broadcast %cst_6 : f32 to vector<8x1xf32>
    %9 = arith.divf %7, %8 : vector<8x1xf32>
    %10 = vector.broadcast %9 : vector<8x1xf32> to vector<8x32xf32>
    %11 = arith.subf %1, %10 : vector<8x32xf32>
    %12 = arith.mulf %11, %11 : vector<8x32xf32>
    %cst_7 = arith.constant dense<0.000000e+00> : vector<8xf32>
    %13 = vector.multi_reduction <add>, %12, %cst_7 [1] : vector<8x32xf32> to vector<8xf32>
    %14 = vector.shape_cast %13 : vector<8xf32> to vector<8x1xf32>
    %cst_8 = arith.constant 3.200000e+01 : f32
    %15 = vector.broadcast %cst_8 : f32 to vector<8x1xf32>
    %16 = arith.divf %14, %15 : vector<8x1xf32>
    %17 = vector.broadcast %9 : vector<8x1xf32> to vector<8x32xf32>
    %18 = arith.subf %1, %17 : vector<8x32xf32>
    %cst_9 = arith.constant 9.99999974E-6 : f32
    %19 = vector.broadcast %cst_9 : f32 to vector<8x1xf32>
    %20 = arith.addf %16, %19 : vector<8x1xf32>
    %21 = math.rsqrt %20 : vector<8x1xf32>
    %22 = vector.broadcast %21 : vector<8x1xf32> to vector<8x32xf32>
    %23 = arith.mulf %18, %22 : vector<8x32xf32>
    %24 = vector.shape_cast %3 : vector<32xf32> to vector<1x32xf32>
    %25 = vector.broadcast %24 : vector<1x32xf32> to vector<8x32xf32>
    %26 = arith.mulf %23, %25 : vector<8x32xf32>
    %27 = vector.shape_cast %5 : vector<32xf32> to vector<1x32xf32>
    %28 = vector.broadcast %27 : vector<1x32xf32> to vector<8x32xf32>
    %29 = arith.addf %26, %28 : vector<8x32xf32>
    %30 = arith.truncf %29 : vector<8x32xf32> to vector<8x32xbf16>
    %c0_10 = arith.constant 0 : index
    %c0_11 = arith.constant 0 : index
    %31 = vector.load %arg5[%c0_10, %c0_11] : memref<32x96xbf16, #tpu.memory_space<vmem>>, vector<32x96xbf16>
    %cst_12 = arith.constant dense<0.000000e+00> : vector<8x96xf32>
    %32 = tpu.matmul %30, %31, %cst_12 {dimension_numbers = #tpu.dot_dimension_numbers<[1], [0], [0], [1], [0, 0, 1, 1], [], []>} : vector<8x32xbf16>, vector<32x96xbf16>, vector<8x96xf32> -> vector<8x96xf32>
    %c0_13 = arith.constant 0 : index
    %c0_14 = arith.constant 0 : index
    %33 = vector.load %arg6[%c0_13, %c0_14] : memref<1x96xf32, #tpu.memory_space<vmem>>, vector<1x96xf32>
    %34 = vector.shape_cast %33 : vector<1x96xf32> to vector<96xf32>
    %35 = vector.shape_cast %34 : vector<96xf32> to vector<1x96xf32>
    %36 = vector.broadcast %35 : vector<1x96xf32> to vector<8x96xf32>
    %37 = arith.addf %32, %36 : vector<8x96xf32>
    %38 = vector.extract_strided_slice %37 {offsets = [0, 0], sizes = [8, 32], strides = [1, 1]} : vector<8x96xf32> to vector<8x32xf32>
    %cst_15 = arith.constant 0.353553385 : f32
    %39 = vector.broadcast %cst_15 : f32 to vector<8x32xf32>
    %40 = arith.mulf %38, %39 : vector<8x32xf32>
    %41 = vector.extract_strided_slice %40 {offsets = [0, 0], sizes = [8, 8], strides = [1, 1]} : vector<8x32xf32> to vector<8x8xf32>
    %42 = arith.truncf %41 : vector<8x8xf32> to vector<8x8xbf16>
    %c0_16 = arith.constant 0 : index
    %c0_17 = arith.constant 0 : index
    %c0_18 = arith.constant 0 : index
    %c0_19 = arith.constant 0 : index
    %43 = vector.load %arg7[%c0_16, %c0_17, %c0_18, %c0_19] : memref<1x4x8x8xbf16, #tpu.memory_space<vmem>>, vector<1x1x8x8xbf16>
    %44 = vector.shape_cast %43 : vector<1x1x8x8xbf16> to vector<8x8xbf16>
    %45 = vector.shape_cast %42 : vector<8x8xbf16> to vector<1x1x8x8xbf16>
    tpu.vector_store %arg7[%c0_16, %c0_17, %c0_18, %c0_19], %45 {strides = array<i32>} : memref<1x4x8x8xbf16, #tpu.memory_space<vmem>>, vector<1x1x8x8xbf16>,
    %46 = vector.extract_strided_slice %37 {offsets = [0, 32], sizes = [8, 8], strides = [1, 1]} : vector<8x96xf32> to vector<8x8xf32>
    %47 = arith.truncf %46 : vector<8x8xf32> to vector<8x8xbf16>
    %c0_20 = arith.constant 0 : index
    %c0_21 = arith.constant 0 : index
    %c0_22 = arith.constant 0 : index
    %c0_23 = arith.constant 0 : index
    %48 = vector.load %arg8[%c0_20, %c0_21, %c0_22, %c0_23] : memref<1x4x8x8xbf16, #tpu.memory_space<vmem>>, vector<1x1x8x8xbf16>
    %49 = vector.shape_cast %48 : vector<1x1x8x8xbf16> to vector<8x8xbf16>
    %50 = vector.shape_cast %47 : vector<8x8xbf16> to vector<1x1x8x8xbf16>
    tpu.vector_store %arg8[%c0_20, %c0_21, %c0_22, %c0_23], %50 {strides = array<i32>} : memref<1x4x8x8xbf16, #tpu.memory_space<vmem>>, vector<1x1x8x8xbf16>,
    %51 = vector.extract_strided_slice %37 {offsets = [0, 64], sizes = [8, 8], strides = [1, 1]} : vector<8x96xf32> to vector<8x8xf32>
    %52 = arith.truncf %51 : vector<8x8xf32> to vector<8x8xbf16>
    %c0_24 = arith.constant 0 : index
    %c0_25 = arith.constant 0 : index
    %c0_26 = arith.constant 0 : index
    %c0_27 = arith.constant 0 : index
    %53 = vector.load %arg9[%c0_24, %c0_25, %c0_26, %c0_27] : memref<1x4x8x8xbf16, #tpu.memory_space<vmem>>, vector<1x1x8x8xbf16>
    %54 = vector.shape_cast %53 : vector<1x1x8x8xbf16> to vector<8x8xbf16>
    %55 = vector.shape_cast %52 : vector<8x8xbf16> to vector<1x1x8x8xbf16>
    tpu.vector_store %arg9[%c0_24, %c0_25, %c0_26, %c0_27], %55 {strides = array<i32>} : memref<1x4x8x8xbf16, #tpu.memory_space<vmem>>, vector<1x1x8x8xbf16>,
    %56 = vector.extract_strided_slice %40 {offsets = [0, 8], sizes = [8, 8], strides = [1, 1]} : vector<8x32xf32> to vector<8x8xf32>
    %57 = arith.truncf %56 : vector<8x8xf32> to vector<8x8xbf16>
    %c0_28 = arith.constant 0 : index
    %c1 = arith.constant 1 : index
    %c0_29 = arith.constant 0 : index
    %c0_30 = arith.constant 0 : index
    %58 = vector.load %arg7[%c0_28, %c1, %c0_29, %c0_30] : memref<1x4x8x8xbf16, #tpu.memory_space<vmem>>, vector<1x1x8x8xbf16>
    %59 = vector.shape_cast %58 : vector<1x1x8x8xbf16> to vector<8x8xbf16>
    %60 = vector.shape_cast %57 : vector<8x8xbf16> to vector<1x1x8x8xbf16>
    tpu.vector_store %arg7[%c0_28, %c1, %c0_29, %c0_30], %60 {strides = array<i32>} : memref<1x4x8x8xbf16, #tpu.memory_space<vmem>>, vector<1x1x8x8xbf16>,
    %61 = vector.extract_strided_slice %37 {offsets = [0, 40], sizes = [8, 8], strides = [1, 1]} : vector<8x96xf32> to vector<8x8xf32>
    %62 = arith.truncf %61 : vector<8x8xf32> to vector<8x8xbf16>
    %c0_31 = arith.constant 0 : index
    %c1_32 = arith.constant 1 : index
    %c0_33 = arith.constant 0 : index
    %c0_34 = arith.constant 0 : index
    %63 = vector.load %arg8[%c0_31, %c1_32, %c0_33, %c0_34] : memref<1x4x8x8xbf16, #tpu.memory_space<vmem>>, vector<1x1x8x8xbf16>
    %64 = vector.shape_cast %63 : vector<1x1x8x8xbf16> to vector<8x8xbf16>
    %65 = vector.shape_cast %62 : vector<8x8xbf16> to vector<1x1x8x8xbf16>
    tpu.vector_store %arg8[%c0_31, %c1_32, %c0_33, %c0_34], %65 {strides = array<i32>} : memref<1x4x8x8xbf16, #tpu.memory_space<vmem>>, vector<1x1x8x8xbf16>,
    %66 = vector.extract_strided_slice %37 {offsets = [0, 72], sizes = [8, 8], strides = [1, 1]} : vector<8x96xf32> to vector<8x8xf32>
    %67 = arith.truncf %66 : vector<8x8xf32> to vector<8x8xbf16>
    %c0_35 = arith.constant 0 : index
    %c1_36 = arith.constant 1 : index
    %c0_37 = arith.constant 0 : index
    %c0_38 = arith.constant 0 : index
    %68 = vector.load %arg9[%c0_35, %c1_36, %c0_37, %c0_38] : memref<1x4x8x8xbf16, #tpu.memory_space<vmem>>, vector<1x1x8x8xbf16>
    %69 = vector.shape_cast %68 : vector<1x1x8x8xbf16> to vector<8x8xbf16>
    %70 = vector.shape_cast %67 : vector<8x8xbf16> to vector<1x1x8x8xbf16>
    tpu.vector_store %arg9[%c0_35, %c1_36, %c0_37, %c0_38], %70 {strides = array<i32>} : memref<1x4x8x8xbf16, #tpu.memory_space<vmem>>, vector<1x1x8x8xbf16>,
    %71 = vector.extract_strided_slice %40 {offsets = [0, 16], sizes = [8, 8], strides = [1, 1]} : vector<8x32xf32> to vector<8x8xf32>
    %72 = arith.truncf %71 : vector<8x8xf32> to vector<8x8xbf16>
    %c0_39 = arith.constant 0 : index
    %c2 = arith.constant 2 : index
    %c0_40 = arith.constant 0 : index
    %c0_41 = arith.constant 0 : index
    %73 = vector.load %arg7[%c0_39, %c2, %c0_40, %c0_41] : memref<1x4x8x8xbf16, #tpu.memory_space<vmem>>, vector<1x1x8x8xbf16>
    %74 = vector.shape_cast %73 : vector<1x1x8x8xbf16> to vector<8x8xbf16>
    %75 = vector.shape_cast %72 : vector<8x8xbf16> to vector<1x1x8x8xbf16>
    tpu.vector_store %arg7[%c0_39, %c2, %c0_40, %c0_41], %75 {strides = array<i32>} : memref<1x4x8x8xbf16, #tpu.memory_space<vmem>>, vector<1x1x8x8xbf16>,
    %76 = vector.extract_strided_slice %37 {offsets = [0, 48], sizes = [8, 8], strides = [1, 1]} : vector<8x96xf32> to vector<8x8xf32>
    %77 = arith.truncf %76 : vector<8x8xf32> to vector<8x8xbf16>
    %c0_42 = arith.constant 0 : index
    %c2_43 = arith.constant 2 : index
    %c0_44 = arith.constant 0 : index
    %c0_45 = arith.constant 0 : index
    %78 = vector.load %arg8[%c0_42, %c2_43, %c0_44, %c0_45] : memref<1x4x8x8xbf16, #tpu.memory_space<vmem>>, vector<1x1x8x8xbf16>
    %79 = vector.shape_cast %78 : vector<1x1x8x8xbf16> to vector<8x8xbf16>
    %80 = vector.shape_cast %77 : vector<8x8xbf16> to vector<1x1x8x8xbf16>
    tpu.vector_store %arg8[%c0_42, %c2_43, %c0_44, %c0_45], %80 {strides = array<i32>} : memref<1x4x8x8xbf16, #tpu.memory_space<vmem>>, vector<1x1x8x8xbf16>,
    %81 = vector.extract_strided_slice %37 {offsets = [0, 80], sizes = [8, 8], strides = [1, 1]} : vector<8x96xf32> to vector<8x8xf32>
    %82 = arith.truncf %81 : vector<8x8xf32> to vector<8x8xbf16>
    %c0_46 = arith.constant 0 : index
    %c2_47 = arith.constant 2 : index
    %c0_48 = arith.constant 0 : index
    %c0_49 = arith.constant 0 : index
    %83 = vector.load %arg9[%c0_46, %c2_47, %c0_48, %c0_49] : memref<1x4x8x8xbf16, #tpu.memory_space<vmem>>, vector<1x1x8x8xbf16>
    %84 = vector.shape_cast %83 : vector<1x1x8x8xbf16> to vector<8x8xbf16>
    %85 = vector.shape_cast %82 : vector<8x8xbf16> to vector<1x1x8x8xbf16>
    tpu.vector_store %arg9[%c0_46, %c2_47, %c0_48, %c0_49], %85 {strides = array<i32>} : memref<1x4x8x8xbf16, #tpu.memory_space<vmem>>, vector<1x1x8x8xbf16>,
    %86 = vector.extract_strided_slice %40 {offsets = [0, 24], sizes = [8, 8], strides = [1, 1]} : vector<8x32xf32> to vector<8x8xf32>
    %87 = arith.truncf %86 : vector<8x8xf32> to vector<8x8xbf16>
    %c0_50 = arith.constant 0 : index
    %c3 = arith.constant 3 : index
    %c0_51 = arith.constant 0 : index
    %c0_52 = arith.constant 0 : index
    %88 = vector.load %arg7[%c0_50, %c3, %c0_51, %c0_52] : memref<1x4x8x8xbf16, #tpu.memory_space<vmem>>, vector<1x1x8x8xbf16>
    %89 = vector.shape_cast %88 : vector<1x1x8x8xbf16> to vector<8x8xbf16>
    %90 = vector.shape_cast %87 : vector<8x8xbf16> to vector<1x1x8x8xbf16>
    tpu.vector_store %arg7[%c0_50, %c3, %c0_51, %c0_52], %90 {strides = array<i32>} : memref<1x4x8x8xbf16, #tpu.memory_space<vmem>>, vector<1x1x8x8xbf16>,
    %91 = vector.extract_strided_slice %37 {offsets = [0, 56], sizes = [8, 8], strides = [1, 1]} : vector<8x96xf32> to vector<8x8xf32>
    %92 = arith.truncf %91 : vector<8x8xf32> to vector<8x8xbf16>
    %c0_53 = arith.constant 0 : index
    %c3_54 = arith.constant 3 : index
    %c0_55 = arith.constant 0 : index
    %c0_56 = arith.constant 0 : index
    %93 = vector.load %arg8[%c0_53, %c3_54, %c0_55, %c0_56] : memref<1x4x8x8xbf16, #tpu.memory_space<vmem>>, vector<1x1x8x8xbf16>
    %94 = vector.shape_cast %93 : vector<1x1x8x8xbf16> to vector<8x8xbf16>
    %95 = vector.shape_cast %92 : vector<8x8xbf16> to vector<1x1x8x8xbf16>
    tpu.vector_store %arg8[%c0_53, %c3_54, %c0_55, %c0_56], %95 {strides = array<i32>} : memref<1x4x8x8xbf16, #tpu.memory_space<vmem>>, vector<1x1x8x8xbf16>,
    %96 = vector.extract_strided_slice %37 {offsets = [0, 88], sizes = [8, 8], strides = [1, 1]} : vector<8x96xf32> to vector<8x8xf32>
    %97 = arith.truncf %96 : vector<8x8xf32> to vector<8x8xbf16>
    %c0_57 = arith.constant 0 : index
    %c3_58 = arith.constant 3 : index
    %c0_59 = arith.constant 0 : index
    %c0_60 = arith.constant 0 : index
    %98 = vector.load %arg9[%c0_57, %c3_58, %c0_59, %c0_60] : memref<1x4x8x8xbf16, #tpu.memory_space<vmem>>, vector<1x1x8x8xbf16>
    %99 = vector.shape_cast %98 : vector<1x1x8x8xbf16> to vector<8x8xbf16>
    %100 = vector.shape_cast %97 : vector<8x8xbf16> to vector<1x1x8x8xbf16>
    tpu.vector_store %arg9[%c0_57, %c3_58, %c0_59, %c0_60], %100 {strides = array<i32>} : memref<1x4x8x8xbf16, #tpu.memory_space<vmem>>, vector<1x1x8x8xbf16>,
    return
  }
  func.func @transform_0(%arg0: i32, %arg1: i32) -> (i32, i32, i32) {
    %c0_i32 = arith.constant 0 : i32
    %c0_i32_0 = arith.constant 0 : i32
    return %arg0, %arg1, %c0_i32 : i32, i32, i32
  }
  func.func @transform_1(%arg0: i32, %arg1: i32) -> (i32, i32) {
    %c0_i32 = arith.constant 0 : i32
    %c0_i32_0 = arith.constant 0 : i32
    %c0_i32_1 = arith.constant 0 : i32
    return %c0_i32, %c0_i32_0 : i32, i32
  }
  func.func @transform_2(%arg0: i32, %arg1: i32) -> (i32, i32) {
    %c0_i32 = arith.constant 0 : i32
    %c0_i32_0 = arith.constant 0 : i32
    %c0_i32_1 = arith.constant 0 : i32
    return %c0_i32, %c0_i32_0 : i32, i32
  }
  func.func @transform_3(%arg0: i32, %arg1: i32) -> (i32, i32) {
    %c0_i32 = arith.constant 0 : i32
    %c0_i32_0 = arith.constant 0 : i32
    %c0_i32_1 = arith.constant 0 : i32
    return %c0_i32, %c0_i32_0 : i32, i32
  }
  func.func @transform_4(%arg0: i32, %arg1: i32) -> (i32, i32) {
    %c0_i32 = arith.constant 0 : i32
    %c0_i32_0 = arith.constant 0 : i32
    %c0_i32_1 = arith.constant 0 : i32
    return %c0_i32, %c0_i32_0 : i32, i32
  }
  func.func @transform_5(%arg0: i32, %arg1: i32) -> (i32, i32, i32, i32) {
    %c0_i32 = arith.constant 0 : i32
    %c0_i32_0 = arith.constant 0 : i32
    %c0_i32_1 = arith.constant 0 : i32
    return %arg0, %c0_i32, %arg1, %c0_i32_0 : i32, i32, i32, i32
  }
  func.func @transform_6(%arg0: i32, %arg1: i32) -> (i32, i32, i32, i32) {
    %c0_i32 = arith.constant 0 : i32
    %c0_i32_0 = arith.constant 0 : i32
    %c0_i32_1 = arith.constant 0 : i32
    return %arg0, %c0_i32, %arg1, %c0_i32_0 : i32, i32, i32, i32
  }
  func.func @transform_7(%arg0: i32, %arg1: i32) -> (i32, i32, i32, i32) {
    %c0_i32 = arith.constant 0 : i32
    %c0_i32_0 = arith.constant 0 : i32
    %c0_i32_1 = arith.constant 0 : i32
    return %arg0, %c0_i32, %arg1, %c0_i32_0 : i32, i32, i32, i32
  }
}

module attributes {stable_mosaic.version = 11 : i64} {
  func.func @ln_qkv_kernel(%arg0: i32, %arg1: i32, %arg2: memref<1x8x32xf32, #tpu.memory_space<vmem>>, %arg3: memref<1x32xf32, #tpu.memory_space<vmem>>, %arg4: memref<1x32xf32, #tpu.memory_space<vmem>>, %arg5: memref<32x96xbf16, #tpu.memory_space<vmem>>, %arg6: memref<1x96xf32, #tpu.memory_space<vmem>>, %arg7: memref<1x4x8x8xbf16, #tpu.memory_space<vmem>>, %arg8: memref<1x4x8x8xbf16, #tpu.memory_space<vmem>>, %arg9: memref<1x4x8x8xbf16, #tpu.memory_space<vmem>>) attributes {dimension_semantics = [#tpu.dimension_semantics<parallel>, #tpu.dimension_semantics<parallel>], iteration_bounds = array<i64: 2, 1>, scalar_prefetch = 0 : i64, scratch_operands = 0 : i64, tpu.core_type = #tpu.core_type<tc>, window_params = [{transform_indices = @transform_0, window_bounds = array<i64: 1, 8, 32>}, {pipeline_mode = #tpu.pipeline_mode<synchronous>, transform_indices = @transform_1, window_bounds = array<i64: 1, 32>}, {pipeline_mode = #tpu.pipeline_mode<synchronous>, transform_indices = @transform_2, window_bounds = array<i64: 1, 32>}, {pipeline_mode = #tpu.pipeline_mode<synchronous>, transform_indices = @transform_3, window_bounds = array<i64: 32, 96>}, {pipeline_mode = #tpu.pipeline_mode<synchronous>, transform_indices = @transform_4, window_bounds = array<i64: 1, 96>}, {transform_indices = @transform_5, window_bounds = array<i64: 1, 4, 8, 8>}, {transform_indices = @transform_6, window_bounds = array<i64: 1, 4, 8, 8>}, {transform_indices = @transform_7, window_bounds = array<i64: 1, 4, 8, 8>}]} {
    %c0 = arith.constant 0 : index
    %c0_0 = arith.constant 0 : index
    %c0_1 = arith.constant 0 : index
    %0 = vector.load %arg2[%c0, %c0_0, %c0_1] : memref<1x8x32xf32, #tpu.memory_space<vmem>>, vector<1x8x32xf32>
    %1 = vector.shape_cast %0 : vector<1x8x32xf32> to vector<8x32xf32>
    %c0_2 = arith.constant 0 : index
    %c0_3 = arith.constant 0 : index
    %2 = vector.load %arg3[%c0_2, %c0_3] : memref<1x32xf32, #tpu.memory_space<vmem>>, vector<1x32xf32>
    %3 = vector.shape_cast %2 : vector<1x32xf32> to vector<32xf32>
    %c0_4 = arith.constant 0 : index
    %c0_5 = arith.constant 0 : index
    %4 = vector.load %arg4[%c0_4, %c0_5] : memref<1x32xf32, #tpu.memory_space<vmem>>, vector<1x32xf32>
    %5 = vector.shape_cast %4 : vector<1x32xf32> to vector<32xf32>
    %cst = arith.constant dense<0.000000e+00> : vector<8xf32>
    %6 = vector.multi_reduction <add>, %1, %cst [1] : vector<8x32xf32> to vector<8xf32>
    %7 = vector.shape_cast %6 : vector<8xf32> to vector<8x1xf32>
    %cst_6 = arith.constant 3.200000e+01 : f32
    %8 = vector.broadcast %cst_6 : f32 to vector<8x1xf32>
    %9 = arith.divf %7, %8 : vector<8x1xf32>
    %10 = vector.broadcast %9 : vector<8x1xf32> to vector<8x32xf32>
    %11 = arith.subf %1, %10 : vector<8x32xf32>
    %12 = arith.mulf %11, %11 : vector<8x32xf32>
    %cst_7 = arith.constant dense<0.000000e+00> : vector<8xf32>
    %13 = vector.multi_reduction <add>, %12, %cst_7 [1] : vector<8x32xf32> to vector<8xf32>
    %14 = vector.shape_cast %13 : vector<8xf32> to vector<8x1xf32>
    %cst_8 = arith.constant 3.200000e+01 : f32
    %15 = vector.broadcast %cst_8 : f32 to vector<8x1xf32>
    %16 = arith.divf %14, %15 : vector<8x1xf32>
    %17 = vector.broadcast %9 : vector<8x1xf32> to vector<8x32xf32>
    %18 = arith.subf %1, %17 : vector<8x32xf32>
    %cst_9 = arith.constant 9.99999974E-6 : f32
    %19 = vector.broadcast %cst_9 : f32 to vector<8x1xf32>
    %20 = arith.addf %16, %19 : vector<8x1xf32>
    %21 = math.rsqrt %20 : vector<8x1xf32>
    %22 = vector.broadcast %21 : vector<8x1xf32> to vector<8x32xf32>
    %23 = arith.mulf %18, %22 : vector<8x32xf32>
    %24 = vector.shape_cast %3 : vector<32xf32> to vector<1x32xf32>
    %25 = vector.broadcast %24 : vector<1x32xf32> to vector<8x32xf32>
    %26 = arith.mulf %23, %25 : vector<8x32xf32>
    %27 = vector.shape_cast %5 : vector<32xf32> to vector<1x32xf32>
    %28 = vector.broadcast %27 : vector<1x32xf32> to vector<8x32xf32>
    %29 = arith.addf %26, %28 : vector<8x32xf32>
    %30 = arith.truncf %29 : vector<8x32xf32> to vector<8x32xbf16>
    %c0_10 = arith.constant 0 : index
    %c0_11 = arith.constant 0 : index
    %31 = vector.load %arg5[%c0_10, %c0_11] : memref<32x96xbf16, #tpu.memory_space<vmem>>, vector<32x96xbf16>
    %cst_12 = arith.constant dense<0.000000e+00> : vector<8x96xf32>
    %32 = tpu.matmul %30, %31, %cst_12 {dimension_numbers = #tpu.dot_dimension_numbers<[1], [0], [0], [1], [0, 0, 1, 1], [], []>} : vector<8x32xbf16>, vector<32x96xbf16>, vector<8x96xf32> -> vector<8x96xf32>
    %c0_13 = arith.constant 0 : index
    %c0_14 = arith.constant 0 : index
    %33 = vector.load %arg6[%c0_13, %c0_14] : memref<1x96xf32, #tpu.memory_space<vmem>>, vector<1x96xf32>
    %34 = vector.shape_cast %33 : vector<1x96xf32> to vector<96xf32>
    %35 = vector.shape_cast %34 : vector<96xf32> to vector<1x96xf32>
    %36 = vector.broadcast %35 : vector<1x96xf32> to vector<8x96xf32>
    %37 = arith.addf %32, %36 : vector<8x96xf32>
    %38 = vector.extract_strided_slice %37 {offsets = [0, 0], sizes = [8, 32], strides = [1, 1]} : vector<8x96xf32> to vector<8x32xf32>
    %cst_15 = arith.constant 0.353553385 : f32
    %39 = vector.broadcast %cst_15 : f32 to vector<8x32xf32>
    %40 = arith.mulf %38, %39 : vector<8x32xf32>
    %41 = vector.extract_strided_slice %40 {offsets = [0, 0], sizes = [8, 8], strides = [1, 1]} : vector<8x32xf32> to vector<8x8xf32>
    %42 = arith.truncf %41 : vector<8x8xf32> to vector<8x8xbf16>
    %c0_16 = arith.constant 0 : index
    %c0_17 = arith.constant 0 : index
    %c0_18 = arith.constant 0 : index
    %c0_19 = arith.constant 0 : index
    %43 = vector.load %arg7[%c0_16, %c0_17, %c0_18, %c0_19] : memref<1x4x8x8xbf16, #tpu.memory_space<vmem>>, vector<1x1x8x8xbf16>
    %44 = vector.shape_cast %43 : vector<1x1x8x8xbf16> to vector<8x8xbf16>
    %45 = vector.shape_cast %42 : vector<8x8xbf16> to vector<1x1x8x8xbf16>
    tpu.vector_store %arg7[%c0_16, %c0_17, %c0_18, %c0_19], %45 {strides = array<i32>} : memref<1x4x8x8xbf16, #tpu.memory_space<vmem>>, vector<1x1x8x8xbf16>,
    %46 = vector.extract_strided_slice %37 {offsets = [0, 32], sizes = [8, 8], strides = [1, 1]} : vector<8x96xf32> to vector<8x8xf32>
    %47 = arith.truncf %46 : vector<8x8xf32> to vector<8x8xbf16>
    %c0_20 = arith.constant 0 : index
    %c0_21 = arith.constant 0 : index
    %c0_22 = arith.constant 0 : index
    %c0_23 = arith.constant 0 : index
    %48 = vector.load %arg8[%c0_20, %c0_21, %c0_22, %c0_23] : memref<1x4x8x8xbf16, #tpu.memory_space<vmem>>, vector<1x1x8x8xbf16>
    %49 = vector.shape_cast %48 : vector<1x1x8x8xbf16> to vector<8x8xbf16>
    %50 = vector.shape_cast %47 : vector<8x8xbf16> to vector<1x1x8x8xbf16>
    tpu.vector_store %arg8[%c0_20, %c0_21, %c0_22, %c0_23], %50 {strides = array<i32>} : memref<1x4x8x8xbf16, #tpu.memory_space<vmem>>, vector<1x1x8x8xbf16>,
    %51 = vector.extract_strided_slice %37 {offsets = [0, 64], sizes = [8, 8], strides = [1, 1]} : vector<8x96xf32> to vector<8x8xf32>
    %52 = arith.truncf %51 : vector<8x8xf32> to vector<8x8xbf16>
    %c0_24 = arith.constant 0 : index
    %c0_25 = arith.constant 0 : index
    %c0_26 = arith.constant 0 : index
    %c0_27 = arith.constant 0 : index
    %53 = vector.load %arg9[%c0_24, %c0_25, %c0_26, %c0_27] : memref<1x4x8x8xbf16, #tpu.memory_space<vmem>>, vector<1x1x8x8xbf16>
    %54 = vector.shape_cast %53 : vector<1x1x8x8xbf16> to vector<8x8xbf16>
    %55 = vector.shape_cast %52 : vector<8x8xbf16> to vector<1x1x8x8xbf16>
    tpu.vector_store %arg9[%c0_24, %c0_25, %c0_26, %c0_27], %55 {strides = array<i32>} : memref<1x4x8x8xbf16, #tpu.memory_space<vmem>>, vector<1x1x8x8xbf16>,
    %56 = vector.extract_strided_slice %40 {offsets = [0, 8], sizes = [8, 8], strides = [1, 1]} : vector<8x32xf32> to vector<8x8xf32>
    %57 = arith.truncf %56 : vector<8x8xf32> to vector<8x8xbf16>
    %c0_28 = arith.constant 0 : index
    %c1 = arith.constant 1 : index
    %c0_29 = arith.constant 0 : index
    %c0_30 = arith.constant 0 : index
    %58 = vector.load %arg7[%c0_28, %c1, %c0_29, %c0_30] : memref<1x4x8x8xbf16, #tpu.memory_space<vmem>>, vector<1x1x8x8xbf16>
    %59 = vector.shape_cast %58 : vector<1x1x8x8xbf16> to vector<8x8xbf16>
    %60 = vector.shape_cast %57 : vector<8x8xbf16> to vector<1x1x8x8xbf16>
    tpu.vector_store %arg7[%c0_28, %c1, %c0_29, %c0_30], %60 {strides = array<i32>} : memref<1x4x8x8xbf16, #tpu.memory_space<vmem>>, vector<1x1x8x8xbf16>,
    %61 = vector.extract_strided_slice %37 {offsets = [0, 40], sizes = [8, 8], strides = [1, 1]} : vector<8x96xf32> to vector<8x8xf32>
    %62 = arith.truncf %61 : vector<8x8xf32> to vector<8x8xbf16>
    %c0_31 = arith.constant 0 : index
    %c1_32 = arith.constant 1 : index
    %c0_33 = arith.constant 0 : index
    %c0_34 = arith.constant 0 : index
    %63 = vector.load %arg8[%c0_31, %c1_32, %c0_33, %c0_34] : memref<1x4x8x8xbf16, #tpu.memory_space<vmem>>, vector<1x1x8x8xbf16>
    %64 = vector.shape_cast %63 : vector<1x1x8x8xbf16> to vector<8x8xbf16>
    %65 = vector.shape_cast %62 : vector<8x8xbf16> to vector<1x1x8x8xbf16>
    tpu.vector_store %arg8[%c0_31, %c1_32, %c0_33, %c0_34], %65 {strides = array<i32>} : memref<1x4x8x8xbf16, #tpu.memory_space<vmem>>, vector<1x1x8x8xbf16>,
    %66 = vector.extract_strided_slice %37 {offsets = [0, 72], sizes = [8, 8], strides = [1, 1]} : vector<8x96xf32> to vector<8x8xf32>
    %67 = arith.truncf %66 : vector<8x8xf32> to vector<8x8xbf16>
    %c0_35 = arith.constant 0 : index
    %c1_36 = arith.constant 1 : index
    %c0_37 = arith.constant 0 : index
    %c0_38 = arith.constant 0 : index
    %68 = vector.load %arg9[%c0_35, %c1_36, %c0_37, %c0_38] : memref<1x4x8x8xbf16, #tpu.memory_space<vmem>>, vector<1x1x8x8xbf16>
    %69 = vector.shape_cast %68 : vector<1x1x8x8xbf16> to vector<8x8xbf16>
    %70 = vector.shape_cast %67 : vector<8x8xbf16> to vector<1x1x8x8xbf16>
    tpu.vector_store %arg9[%c0_35, %c1_36, %c0_37, %c0_38], %70 {strides = array<i32>} : memref<1x4x8x8xbf16, #tpu.memory_space<vmem>>, vector<1x1x8x8xbf16>,
    %71 = vector.extract_strided_slice %40 {offsets = [0, 16], sizes = [8, 8], strides = [1, 1]} : vector<8x32xf32> to vector<8x8xf32>
    %72 = arith.truncf %71 : vector<8x8xf32> to vector<8x8xbf16>
    %c0_39 = arith.constant 0 : index
    %c2 = arith.constant 2 : index
    %c0_40 = arith.constant 0 : index
    %c0_41 = arith.constant 0 : index
    %73 = vector.load %arg7[%c0_39, %c2, %c0_40, %c0_41] : memref<1x4x8x8xbf16, #tpu.memory_space<vmem>>, vector<1x1x8x8xbf16>
    %74 = vector.shape_cast %73 : vector<1x1x8x8xbf16> to vector<8x8xbf16>
    %75 = vector.shape_cast %72 : vector<8x8xbf16> to vector<1x1x8x8xbf16>
    tpu.vector_store %arg7[%c0_39, %c2, %c0_40, %c0_41], %75 {strides = array<i32>} : memref<1x4x8x8xbf16, #tpu.memory_space<vmem>>, vector<1x1x8x8xbf16>,
    %76 = vector.extract_strided_slice %37 {offsets = [0, 48], sizes = [8, 8], strides = [1, 1]} : vector<8x96xf32> to vector<8x8xf32>
    %77 = arith.truncf %76 : vector<8x8xf32> to vector<8x8xbf16>
    %c0_42 = arith.constant 0 : index
    %c2_43 = arith.constant 2 : index
    %c0_44 = arith.constant 0 : index
    %c0_45 = arith.constant 0 : index
    %78 = vector.load %arg8[%c0_42, %c2_43, %c0_44, %c0_45] : memref<1x4x8x8xbf16, #tpu.memory_space<vmem>>, vector<1x1x8x8xbf16>
    %79 = vector.shape_cast %78 : vector<1x1x8x8xbf16> to vector<8x8xbf16>
    %80 = vector.shape_cast %77 : vector<8x8xbf16> to vector<1x1x8x8xbf16>
    tpu.vector_store %arg8[%c0_42, %c2_43, %c0_44, %c0_45], %80 {strides = array<i32>} : memref<1x4x8x8xbf16, #tpu.memory_space<vmem>>, vector<1x1x8x8xbf16>,
    %81 = vector.extract_strided_slice %37 {offsets = [0, 80], sizes = [8, 8], strides = [1, 1]} : vector<8x96xf32> to vector<8x8xf32>
    %82 = arith.truncf %81 : vector<8x8xf32> to vector<8x8xbf16>
    %c0_46 = arith.constant 0 : index
    %c2_47 = arith.constant 2 : index
    %c0_48 = arith.constant 0 : index
    %c0_49 = arith.constant 0 : index
    %83 = vector.load %arg9[%c0_46, %c2_47, %c0_48, %c0_49] : memref<1x4x8x8xbf16, #tpu.memory_space<vmem>>, vector<1x1x8x8xbf16>
    %84 = vector.shape_cast %83 : vector<1x1x8x8xbf16> to vector<8x8xbf16>
    %85 = vector.shape_cast %82 : vector<8x8xbf16> to vector<1x1x8x8xbf16>
    tpu.vector_store %arg9[%c0_46, %c2_47, %c0_48, %c0_49], %85 {strides = array<i32>} : memref<1x4x8x8xbf16, #tpu.memory_space<vmem>>, vector<1x1x8x8xbf16>,
    %86 = vector.extract_strided_slice %40 {offsets = [0, 24], sizes = [8, 8], strides = [1, 1]} : vector<8x32xf32> to vector<8x8xf32>
    %87 = arith.truncf %86 : vector<8x8xf32> to vector<8x8xbf16>
    %c0_50 = arith.constant 0 : index
    %c3 = arith.constant 3 : index
    %c0_51 = arith.constant 0 : index
    %c0_52 = arith.constant 0 : index
    %88 = vector.load %arg7[%c0_50, %c3, %c0_51, %c0_52] : memref<1x4x8x8xbf16, #tpu.memory_space<vmem>>, vector<1x1x8x8xbf16>
    %89 = vector.shape_cast %88 : vector<1x1x8x8xbf16> to vector<8x8xbf16>
    %90 = vector.shape_cast %87 : vector<8x8xbf16> to vector<1x1x8x8xbf16>
    tpu.vector_store %arg7[%c0_50, %c3, %c0_51, %c0_52], %90 {strides = array<i32>} : memref<1x4x8x8xbf16, #tpu.memory_space<vmem>>, vector<1x1x8x8xbf16>,
    %91 = vector.extract_strided_slice %37 {offsets = [0, 56], sizes = [8, 8], strides = [1, 1]} : vector<8x96xf32> to vector<8x8xf32>
    %92 = arith.truncf %91 : vector<8x8xf32> to vector<8x8xbf16>
    %c0_53 = arith.constant 0 : index
    %c3_54 = arith.constant 3 : index
    %c0_55 = arith.constant 0 : index
    %c0_56 = arith.constant 0 : index
    %93 = vector.load %arg8[%c0_53, %c3_54, %c0_55, %c0_56] : memref<1x4x8x8xbf16, #tpu.memory_space<vmem>>, vector<1x1x8x8xbf16>
    %94 = vector.shape_cast %93 : vector<1x1x8x8xbf16> to vector<8x8xbf16>
    %95 = vector.shape_cast %92 : vector<8x8xbf16> to vector<1x1x8x8xbf16>
    tpu.vector_store %arg8[%c0_53, %c3_54, %c0_55, %c0_56], %95 {strides = array<i32>} : memref<1x4x8x8xbf16, #tpu.memory_space<vmem>>, vector<1x1x8x8xbf16>,
    %96 = vector.extract_strided_slice %37 {offsets = [0, 88], sizes = [8, 8], strides = [1, 1]} : vector<8x96xf32> to vector<8x8xf32>
    %97 = arith.truncf %96 : vector<8x8xf32> to vector<8x8xbf16>
    %c0_57 = arith.constant 0 : index
    %c3_58 = arith.constant 3 : index
    %c0_59 = arith.constant 0 : index
    %c0_60 = arith.constant 0 : index
    %98 = vector.load %arg9[%c0_57, %c3_58, %c0_59, %c0_60] : memref<1x4x8x8xbf16, #tpu.memory_space<vmem>>, vector<1x1x8x8xbf16>
    %99 = vector.shape_cast %98 : vector<1x1x8x8xbf16> to vector<8x8xbf16>
    %100 = vector.shape_cast %97 : vector<8x8xbf16> to vector<1x1x8x8xbf16>
    tpu.vector_store %arg9[%c0_57, %c3_58, %c0_59, %c0_60], %100 {strides = array<i32>} : memref<1x4x8x8xbf16, #tpu.memory_space<vmem>>, vector<1x1x8x8xbf16>,
    return
  }
  func.func @transform_0(%arg0: i32, %arg1: i32) -> (i32, i32, i32) {
    %c0_i32 = arith.constant 0 : i32
    %c0_i32_0 = arith.constant 0 : i32
    return %arg0, %arg1, %c0_i32 : i32, i32, i32
  }
  func.func @transform_1(%arg0: i32, %arg1: i32) -> (i32, i32) {
    %c0_i32 = arith.constant 0 : i32
    %c0_i32_0 = arith.constant 0 : i32
    %c0_i32_1 = arith.constant 0 : i32
    return %c0_i32, %c0_i32_0 : i32, i32
  }
  func.func @transform_2(%arg0: i32, %arg1: i32) -> (i32, i32) {
    %c0_i32 = arith.constant 0 : i32
    %c0_i32_0 = arith.constant 0 : i32
    %c0_i32_1 = arith.constant 0 : i32
    return %c0_i32, %c0_i32_0 : i32, i32
  }
  func.func @transform_3(%arg0: i32, %arg1: i32) -> (i32, i32) {
    %c0_i32 = arith.constant 0 : i32
    %c0_i32_0 = arith.constant 0 : i32
    %c0_i32_1 = arith.constant 0 : i32
    return %c0_i32, %c0_i32_0 : i32, i32
  }
  func.func @transform_4(%arg0: i32, %arg1: i32) -> (i32, i32) {
    %c0_i32 = arith.constant 0 : i32
    %c0_i32_0 = arith.constant 0 : i32
    %c0_i32_1 = arith.constant 0 : i32
    return %c0_i32, %c0_i32_0 : i32, i32
  }
  func.func @transform_5(%arg0: i32, %arg1: i32) -> (i32, i32, i32, i32) {
    %c0_i32 = arith.constant 0 : i32
    %c0_i32_0 = arith.constant 0 : i32
    %c0_i32_1 = arith.constant 0 : i32
    return %arg0, %c0_i32, %arg1, %c0_i32_0 : i32, i32, i32, i32
  }
  func.func @transform_6(%arg0: i32, %arg1: i32) -> (i32, i32, i32, i32) {
    %c0_i32 = arith.constant 0 : i32
    %c0_i32_0 = arith.constant 0 : i32
    %c0_i32_1 = arith.constant 0 : i32
    return %arg0, %c0_i32, %arg1, %c0_i32_0 : i32, i32, i32, i32
  }
  func.func @transform_7(%arg0: i32, %arg1: i32) -> (i32, i32, i32, i32) {
    %c0_i32 = arith.constant 0 : i32
    %c0_i32_0 = arith.constant 0 : i32
    %c0_i32_1 = arith.constant 0 : i32
    return %arg0, %c0_i32, %arg1, %c0_i32_0 : i32, i32, i32, i32
  }
}

</mosaic_0001>

<llo_original>
// kernel: tpu_custom_call.1
$region0: #{tpu_custom_call.1}
  #allocation0 [shape = 'u32[]', space=smem, size = 0x4, offset = 0x4, fixed_abs, tag = 'smem constant byte address 0x4 - core index']
  #allocation1 [shape = 'u32[144,128]{1,0:T(1,128)}', space=vmem, size = 0x12000, scoped, tag = 'internal scratch']
  %s0 = inlined_call_operand.hbm [shape: f32[2,8,32], index: 0, kind: input, shape index: {}]
  %s1 = inlined_call_operand.vmem [shape: f32[1,32], index: 1, kind: input, shape index: {}]
  %s2 = inlined_call_operand.vmem [shape: f32[1,32], index: 2, kind: input, shape index: {}]
  %s3 = inlined_call_operand.hbm [shape: bf16[32,96], index: 3, kind: input, shape index: {}]
  %s4 = inlined_call_operand.vmem [shape: f32[1,96], index: 4, kind: input, shape index: {}]
  %s5 = inlined_call_operand.hbm [shape: bf16[2,4,8,8], index: 5, kind: output, shape index: {0}]
  %s6 = inlined_call_operand.hbm [shape: bf16[2,4,8,8], index: 6, kind: output, shape index: {1}]
  %s7 = inlined_call_operand.hbm [shape: bf16[2,4,8,8], index: 7, kind: output, shape index: {2}]
  %8 = xla_tuple %s5, %s6, %s7
  %s9 = sld [smem:[#allocation0]]
  $region77: #{tpu_custom_call.1} parent=0
    _
  %s11 = ssub.s32 1, %s9
  %s12 = scalar_select 0, %s11, %s9
  $region1: #{tpu_custom_call.1} parent=0
    #allocation2 [shape = 'u8[8192]{0}', space=vmem, size = 0x2000, scoped, tag = 'input window, operand 0']
    #allocation3 [shape = 's32[2]{0}', space=sflag, size = 0x8, scoped, tag = 'scoped memory for tpu_custom_call.1']
    #allocation4 [shape = 's32[2]{0}', space=sflag, size = 0x8, scoped, tag = 'scoped memory for tpu_custom_call.1']
    #allocation5 [shape = 'u8[8192]{0}', space=vmem, size = 0x2000, scoped, tag = 'input window, operand 3, single buffered']
    #allocation6 [shape = 's32[1]{0}', space=sflag, size = 0x4, scoped, tag = 'scoped memory for tpu_custom_call.1']
    #allocation7 [shape = 'u8[16384]{0}', space=vmem, size = 0x4000, scoped, tag = 'output window, operand 0']
    #allocation8 [shape = 'u8[16384]{0}', space=vmem, size = 0x4000, scoped, tag = 'output window, operand 1']
    #allocation9 [shape = 's32[2]{0}', space=sflag, size = 0x8, scoped, tag = 'scoped memory for tpu_custom_call.1']
    #allocation10 [shape = 'u8[16384]{0}', space=vmem, size = 0x4000, scoped, tag = 'output window, operand 2']
    %13 = vsyncpa [#allocation3], 0
    %s14 = scalar_lea.sflag [#allocation3], 1
    %15 = vsyncpa %s14, 0
    %16 = vsyncpa [#allocation6], 0
    %17 = vsyncpa [#allocation4], 0
    %s18 = scalar_lea.sflag [#allocation4], 1
    %19 = vsyncpa %s18, 0
    %20 = vsyncpa [#allocation9], 0
    %s21 = scalar_lea.sflag [#allocation9], 1
    %22 = vsyncpa %s21, 0
    loop: start=0, step=1, limit=4
    $region2: #{tpu_custom_call.1} parent=1 // loop_pre_header
      _
    $region3: #{tpu_custom_call.1} parent=1 // loop_header
      %s24 = sphi 0, %s28
      %p25 = scmp.ge.s32.totalorder %s24, 4
      %s31 = sphi 0, %s43
      %s32 = sphi 0, %s39
      %s33 = sphi 0, %s31
      %s34 = sphi 0, %s32
      %s35 = sphi 0, %s33
      %s36 = sphi 0, %s34
      %s48 = sphi 0, %s50
      %s51 = sphi 0, %s48
      %s52 = sphi 0, %s51
      %s68 = sphi 0, %s52
      %s72 = sphi 0, %s72
      %s74 = sphi 0, %s72
      %s75 = sphi 0, %s74
      %s89 = sphi 0, %s75
      %s93 = sphi 0, %s93
      %s95 = sphi 0, %s93
      %s96 = sphi 0, %s95
      %s110 = sphi 0, %s96
      %s114 = sphi 0, %s114
      %s116 = sphi 0, %s114
      %s117 = sphi 0, %s116
      %s131 = sphi 0, %s117
      %s135 = sphi 0, %s135
      %s137 = sphi 0, %s135
      %s138 = sphi 0, %s137
      %s152 = sphi 0, %s138
      %s160 = sphi 0, %s162
      %s163 = sphi 0, %s160
      %s164 = sphi 0, %s163
      %s180 = sphi 0, %s164
      %s188 = sphi 0, %s190
      %s191 = sphi 0, %s188
      %s192 = sphi 0, %s191
      %s208 = sphi 0, %s192
      %s216 = sphi 0, %s218
      %s219 = sphi 0, %s216
      %s220 = sphi 0, %s219
      %s236 = sphi 0, %s220
    $region4: #{tpu_custom_call.1} parent=1 // loop_header_branch
      %27 = sbr.rel (%p25) target = $region8
    $region5: #{tpu_custom_call.1} parent=1 // loop_body
      %s29 = ssub.s32 %s24, 1
      %s30 = ssub.s32 %s24, 2
      %s37 = sadd.s32 1, %s32
      %p38 = scmp.ge.s32.totalorder %s37, 1
      %s39 = scalar_select %p38, 0, %s37
      %s40 = sadd.s32 1, %s31
      %s41 = scalar_select %p38, %s40, %s31
      %p42 = scmp.ge.s32.totalorder %s41, 2
      %s43 = scalar_select %p42, 0, %s41
      %s44 = ssub.s32 %s31, %s43
      %s45 = ssub.s32 %s32, %s39
      %s46 = sor.u32 %s44, %s45
      %p47 = scmp.eq.s32.totalorder %s46, 0
      %s49 = sadd.s32 %s48, 1
      %s50 = scalar_select %p47, %s48, %s49
      %p53 = pneg %p47
      %p54 = scmp.eq.s32.totalorder %s24, 1
      %p55 = por %p53, %p54
      %p56 = scmp.ne.s32.totalorder %s48, %s51
      %p57 = scmp.eq.s32.totalorder %s24, 0
      %p58 = por %p56, %p57
      %p59 = scmp.ne.s32.totalorder %s48, %s51
      %p60 = scmp.eq.s32.totalorder %s29, 1
      %p61 = por %p59, %p60
      %p62 = scmp.ne.s32.totalorder %s51, %s52
      %p63 = scmp.eq.s32.totalorder %s29, 0
      %p64 = por %p62, %p63
      %p65 = scmp.ne.s32.totalorder %s51, %s52
      %p66 = scmp.eq.s32.totalorder %s30, 1
      %p67 = por %p65, %p66
      %p69 = scmp.ne.s32.totalorder %s52, %s68
      %p70 = scmp.eq.s32.totalorder %s30, 0
      %p71 = por %p69, %p70
      %s73 = sadd.s32 %s72, 1
      %p76 = scmp.eq.s32.totalorder %s24, 1
      %p77 = scmp.ne.s32.totalorder %s72, %s74
      %p78 = scmp.eq.s32.totalorder %s24, 0
      %p79 = por %p77, %p78
      %p80 = scmp.ne.s32.totalorder %s72, %s74
      %p81 = scmp.eq.s32.totalorder %s29, 1
      %p82 = por %p80, %p81
      %p83 = scmp.ne.s32.totalorder %s74, %s75
      %p84 = scmp.eq.s32.totalorder %s29, 0
      %p85 = por %p83, %p84
      %p86 = scmp.ne.s32.totalorder %s74, %s75
      %p87 = scmp.eq.s32.totalorder %s30, 1
      %p88 = por %p86, %p87
      %p90 = scmp.ne.s32.totalorder %s75, %s89
      %p91 = scmp.eq.s32.totalorder %s30, 0
      %p92 = por %p90, %p91
      %s94 = sadd.s32 %s93, 1
      %p97 = scmp.eq.s32.totalorder %s24, 1
      %p98 = scmp.ne.s32.totalorder %s93, %s95
      %p99 = scmp.eq.s32.totalorder %s24, 0
      %p100 = por %p98, %p99
      %p101 = scmp.ne.s32.totalorder %s93, %s95
      %p102 = scmp.eq.s32.totalorder %s29, 1
      %p103 = por %p101, %p102
      %p104 = scmp.ne.s32.totalorder %s95, %s96
      %p105 = scmp.eq.s32.totalorder %s29, 0
      %p106 = por %p104, %p105
      %p107 = scmp.ne.s32.totalorder %s95, %s96
      %p108 = scmp.eq.s32.totalorder %s30, 1
      %p109 = por %p107, %p108
      %p111 = scmp.ne.s32.totalorder %s96, %s110
      %p112 = scmp.eq.s32.totalorder %s30, 0
      %p113 = por %p111, %p112
      %s115 = sadd.s32 %s114, 1
      %p118 = scmp.eq.s32.totalorder %s24, 1
      %p119 = scmp.ne.s32.totalorder %s114, %s116
      %p120 = scmp.eq.s32.totalorder %s24, 0
      %p121 = por %p119, %p120
      %p122 = scmp.ne.s32.totalorder %s114, %s116
      %p123 = scmp.eq.s32.totalorder %s29, 1
      %p124 = por %p122, %p123
      %p125 = scmp.ne.s32.totalorder %s116, %s117
      %p126 = scmp.eq.s32.totalorder %s29, 0
      %p127 = por %p125, %p126
      %p128 = scmp.ne.s32.totalorder %s116, %s117
      %p129 = scmp.eq.s32.totalorder %s30, 1
      %p130 = por %p128, %p129
      %p132 = scmp.ne.s32.totalorder %s117, %s131
      %p133 = scmp.eq.s32.totalorder %s30, 0
      %p134 = por %p132, %p133
      %s136 = sadd.s32 %s135, 1
      %p139 = scmp.eq.s32.totalorder %s24, 1
      %p140 = scmp.ne.s32.totalorder %s135, %s137
      %p141 = scmp.eq.s32.totalorder %s24, 0
      %p142 = por %p140, %p141
      %p143 = scmp.ne.s32.totalorder %s135, %s137
      %p144 = scmp.eq.s32.totalorder %s29, 1
      %p145 = por %p143, %p144
      %p146 = scmp.ne.s32.totalorder %s137, %s138
      %p147 = scmp.eq.s32.totalorder %s29, 0
      %p148 = por %p146, %p147
      %p149 = scmp.ne.s32.totalorder %s137, %s138
      %p150 = scmp.eq.s32.totalorder %s30, 1
      %p151 = por %p149, %p150
      %p153 = scmp.ne.s32.totalorder %s138, %s152
      %p154 = scmp.eq.s32.totalorder %s30, 0
      %p155 = por %p153, %p154
      %s156 = ssub.s32 %s31, %s43
      %s157 = ssub.s32 %s32, %s39
      %s158 = sor.u32 %s156, %s157
      %p159 = scmp.eq.s32.totalorder %s158, 0
      %s161 = sadd.s32 %s160, 1
      %s162 = scalar_select %p159, %s160, %s161
      %p165 = pneg %p159
      %p166 = scmp.eq.s32.totalorder %s24, 1
      %p167 = por %p165, %p166
      %p168 = scmp.ne.s32.totalorder %s160, %s163
      %p169 = scmp.eq.s32.totalorder %s24, 0
      %p170 = por %p168, %p169
      %p171 = scmp.ne.s32.totalorder %s160, %s163
      %p172 = scmp.eq.s32.totalorder %s29, 1
      %p173 = por %p171, %p172
      %p174 = scmp.ne.s32.totalorder %s163, %s164
      %p175 = scmp.eq.s32.totalorder %s29, 0
      %p176 = por %p174, %p175
      %p177 = scmp.ne.s32.totalorder %s163, %s164
      %p178 = scmp.eq.s32.totalorder %s30, 1
      %p179 = por %p177, %p178
      %p181 = scmp.ne.s32.totalorder %s164, %s180
      %p182 = scmp.eq.s32.totalorder %s30, 0
      %p183 = por %p181, %p182
      %s184 = ssub.s32 %s31, %s43
      %s185 = ssub.s32 %s32, %s39
      %s186 = sor.u32 %s184, %s185
      %p187 = scmp.eq.s32.totalorder %s186, 0
      %s189 = sadd.s32 %s188, 1
      %s190 = scalar_select %p187, %s188, %s189
      %p193 = pneg %p187
      %p194 = scmp.eq.s32.totalorder %s24, 1
      %p195 = por %p193, %p194
      %p196 = scmp.ne.s32.totalorder %s188, %s191
      %p197 = scmp.eq.s32.totalorder %s24, 0
      %p198 = por %p196, %p197
      %p199 = scmp.ne.s32.totalorder %s188, %s191
      %p200 = scmp.eq.s32.totalorder %s29, 1
      %p201 = por %p199, %p200
      %p202 = scmp.ne.s32.totalorder %s191, %s192
      %p203 = scmp.eq.s32.totalorder %s29, 0
      %p204 = por %p202, %p203
      %p205 = scmp.ne.s32.totalorder %s191, %s192
      %p206 = scmp.eq.s32.totalorder %s30, 1
      %p207 = por %p205, %p206
      %p209 = scmp.ne.s32.totalorder %s192, %s208
      %p210 = scmp.eq.s32.totalorder %s30, 0
      %p211 = por %p209, %p210
      %s212 = ssub.s32 %s31, %s43
      %s213 = ssub.s32 %s32, %s39
      %s214 = sor.u32 %s212, %s213
      %p215 = scmp.eq.s32.totalorder %s214, 0
      %s217 = sadd.s32 %s216, 1
      %s218 = scalar_select %p215, %s216, %s217
      %p221 = pneg %p215
      %p222 = scmp.eq.s32.totalorder %s24, 1
      %p223 = por %p221, %p222
      %p224 = scmp.ne.s32.totalorder %s216, %s219
      %p225 = scmp.eq.s32.totalorder %s24, 0
      %p226 = por %p224, %p225
      %p227 = scmp.ne.s32.totalorder %s216, %s219
      %p228 = scmp.eq.s32.totalorder %s29, 1
      %p229 = por %p227, %p228
      %p230 = scmp.ne.s32.totalorder %s219, %s220
      %p231 = scmp.eq.s32.totalorder %s29, 0
      %p232 = por %p230, %p231
      %p233 = scmp.ne.s32.totalorder %s219, %s220
      %p234 = scmp.eq.s32.totalorder %s30, 1
      %p235 = por %p233, %p234
      %p237 = scmp.ne.s32.totalorder %s220, %s236
      %p238 = scmp.eq.s32.totalorder %s30, 0
      %p239 = por %p237, %p238
      %p240 = scmp.le.s32.totalorder 1, %s24
      %p241 = scmp.lt.s32.totalorder %s24, 3
      %p242 = pnand %p240, %p241
      %p243 = pneg %p242
      // Predicated region
      $region9: #{tpu_custom_call.1} parent=5 // pred_check
        _
      $region10: #{tpu_custom_call.1} parent=5 // pred_check_branch
        %245 = sbr.rel (%p242) target = $region12
      $region11: #{tpu_custom_call.1} parent=5 // pred_region
        %s246 = ssub.s32 %s24, 1
        // Predicated region
        $region13: #{tpu_custom_call.1} parent=11 // pred_check
          %p247 = pneg %p85
        $region14: #{tpu_custom_call.1} parent=11 // pred_check_branch
          %249 = sbr.rel (%p247) target = $region16
        $region15: #{tpu_custom_call.1} parent=11 // pred_region
          _
        $region16: #{tpu_custom_call.1} parent=11 // pred_fallthru
          _
        // Predicated region
        $region17: #{tpu_custom_call.1} parent=11 // pred_check
          %p250 = pneg %p106
        $region18: #{tpu_custom_call.1} parent=11 // pred_check_branch
          %252 = sbr.rel (%p250) target = $region20
        $region19: #{tpu_custom_call.1} parent=11 // pred_region
          _
        $region20: #{tpu_custom_call.1} parent=11 // pred_fallthru
          _
        // Predicated region
        $region21: #{tpu_custom_call.1} parent=11 // pred_check
          %p253 = pneg %p127
        $region22: #{tpu_custom_call.1} parent=11 // pred_check_branch
          %255 = sbr.rel (%p253) target = $region24
        $region23: #{tpu_custom_call.1} parent=11 // pred_region
          %s257 = ssub.s32 256, 256
          %258 = vsyncadd [#allocation6], %s257
          %s259 = sshll.u32 [#allocation5], 4
          %s260 = int_to_ptr.vmem [resolvable:$true] %s259
          %265 = dma.hbm_to_vmem [thread:$0]  %s3, 256, %s260, [#allocation6], 64, 64, 4
        $region24: #{tpu_custom_call.1} parent=11 // pred_fallthru
          _
        // Predicated region
        $region25: #{tpu_custom_call.1} parent=11 // pred_check
          %p266 = pneg %p148
        $region26: #{tpu_custom_call.1} parent=11 // pred_check_branch
          %268 = sbr.rel (%p266) target = $region28
        $region27: #{tpu_custom_call.1} parent=11 // pred_region
          _
        $region28: #{tpu_custom_call.1} parent=11 // pred_fallthru
          _
      $region12: #{tpu_custom_call.1} parent=5 // pred_fallthru
        _
      %p269 = scmp.lt.s32.totalorder %s24, 2
      // Predicated region
      $region29: #{tpu_custom_call.1} parent=5 // pred_check
        %p270 = pneg %p269
      $region30: #{tpu_custom_call.1} parent=5 // pred_check_branch
        %272 = sbr.rel (%p270) target = $region32
      $region31: #{tpu_custom_call.1} parent=5 // pred_region
        // Predicated region
        $region33: #{tpu_custom_call.1} parent=31 // pred_check
          %p273 = pneg %p58
        $region34: #{tpu_custom_call.1} parent=31 // pred_check_branch
          %275 = sbr.rel (%p273) target = $region36
        $region35: #{tpu_custom_call.1} parent=31 // pred_region
          %s276 = sand.u32 %s48, 1
          %s277 = scalar_lea.sflag [#allocation3], %s276
          %s278 = sand.u32 %s48, 1
          %s279 = smul.addr %s278, 8
          %s280 = scalar_lea.vmem [#allocation2], %s279
          %s282 = ssub.s32 128, 128
          %283 = vsyncadd %s277, %s282
          %s284 = sadd.s32 %s32, %s31
          %s285 = smul.addr %s284, 128
          %s286 = scalar_lea.hbm %s0, %s285
          %s288 = sshll.u32 %s280, 4
          %s289 = int_to_ptr.vmem [resolvable:$true] %s288
          %291 = dma.hbm_to_vmem [thread:$0]  %s286, 128, %s289, %s277
        $region36: #{tpu_custom_call.1} parent=31 // pred_fallthru
          _
      $region32: #{tpu_custom_call.1} parent=5 // pred_fallthru
        _
      %p292 = scmp.le.s32.totalorder 1, %s24
      %p293 = scmp.lt.s32.totalorder %s24, 3
      %p294 = pnand %p292, %p293
      %p295 = pneg %p294
      // Predicated region
      $region37: #{tpu_custom_call.1} parent=5 // pred_check
        _
      $region38: #{tpu_custom_call.1} parent=5 // pred_check_branch
        %297 = sbr.rel (%p294) target = $region40
      $region39: #{tpu_custom_call.1} parent=5 // pred_region
        %s298 = ssub.s32 %s24, 1
        %s299 = sand.u32 %s51, 1
        %s300 = scalar_lea.sflag [#allocation3], %s299
        %s301 = sand.u32 %s51, 1
        %s302 = smul.addr %s301, 8
        %s303 = scalar_lea.vmem [#allocation2], %s302
        // Predicated region
        $region41: #{tpu_custom_call.1} parent=39 // pred_check
          %p304 = pneg %p64
        $region42: #{tpu_custom_call.1} parent=39 // pred_check_branch
          %306 = sbr.rel (%p304) target = $region44
        $region43: #{tpu_custom_call.1} parent=39 // pred_region
          %307 = dma.done %s300, 128
        $region44: #{tpu_custom_call.1} parent=39 // pred_fallthru
          _
        // Predicated region
        $region45: #{tpu_custom_call.1} parent=39 // pred_check
          %p308 = pneg %p127
        $region46: #{tpu_custom_call.1} parent=39 // pred_check_branch
          %310 = sbr.rel (%p308) target = $region48
        $region47: #{tpu_custom_call.1} parent=39 // pred_region
          %311 = dma.done [#allocation6], 256
        $region48: #{tpu_custom_call.1} parent=39 // pred_fallthru
          _
        %s312 = sand.u32 %s51, 1
        %s313 = scalar_lea.sflag [#allocation3], %s312
        %s314 = sand.u32 %s51, 1
        %s315 = smul.addr %s314, 8
        %s316 = scalar_lea.vmem [#allocation2], %s315
        %p317 = pneg %p64
        %p318 = pneg %p61
        %p319 = pneg %p85
        %p320 = pneg %p82
        %p321 = pneg %p106
        %p322 = pneg %p103
        %p323 = pneg %p127
        %p324 = pneg %p124
        %p325 = pneg %p148
        %p326 = pneg %p145
        %p327 = pneg %p176
        %p328 = pneg %p173
        %s329 = sand.u32 %s163, 1
        %s330 = scalar_lea.sflag [#allocation4], %s329
        %s331 = sand.u32 %s163, 1
        %s332 = smul.addr %s331, 16
        %s333 = scalar_lea.vmem [#allocation7], %s332
        %p334 = pneg %p204
        %p335 = pneg %p201
        %s336 = sand.u32 %s29, 1
        %s337 = scalar_lea.sflag [#allocation9], %s336
        %s338 = sand.u32 %s191, 1
        %s339 = smul.addr %s338, 16
        %s340 = scalar_lea.vmem [#allocation8], %s339
        %p341 = pneg %p232
        %p342 = pneg %p229
        %s343 = sand.u32 %s29, 1
        %s344 = scalar_lea.sflag [#allocation9], %s343
        %s345 = sand.u32 %s219, 1
        %s346 = smul.addr %s345, 16
        %s347 = scalar_lea.vmem [#allocation10], %s346
        %v349 = vld [vmem:[%s303] sm:$0xff]
        %v350 = vld [vmem:[%s1] sm:$0x1]
        %v351 = vld [vmem:[%s2] sm:$0x1]
        %vm352 = vcmask 261120
        %v353 = vsel %vm352, %v349, 0.0
        %354 = vadd.xlane.f32.xlu0 %v353
        %v355 = vpop.xlane.xlu0 %354
        %v356 = vrcp.pop 32.0
        %v357 = vmul.f32 %v355, %v356
        %v358 = vsub.f32 %v349, %v357
        %v359 = vmul.f32 %v358, %v358
        %v360 = vsel %vm352, %v359, 0.0
        %361 = vadd.xlane.f32.xlu0 %v360
        %v362 = vpop.xlane.xlu0 %361
        %v363 = vmul.f32 %v362, %v356
        %v364 = vadd.f32 %v363, 1e-05
        %v365 = vrsqrt.pop %v364
        %v366 = vmul.f32 %v358, %v365
        %v368 = vlaneseq
        %v369 = vshrl.u32 %v368, 7
        %v370 = vsub.s32 0, %v369
        %v371 = vrot.slane %v350, %v370
        %v373 = vmul.f32 %v366, %v371
        %v375 = vlaneseq
        %v376 = vshrl.u32 %v375, 7
        %v377 = vsub.s32 0, %v376
        %v378 = vrot.slane %v351, %v377
        %v380 = vadd.f32 %v373, %v378
        %v381 = vpack.c.bf16 %v380, %v380
        %v382 = vld [vmem:[#allocation5] sm:$0xf]
        %v383 = vld [vmem:[#allocation5 + $0x4] sm:$0xf]
        %v384 = vld [vmem:[#allocation5 + $0x8] sm:$0xf]
        %v385 = vld [vmem:[#allocation5 + $0xc] sm:$0xf]
        %v386 = vld [vmem:[%s4] sm:$0x1]
        %v388 = vlaneseq
        %v389 = vshrl.u32 %v388, 7
        %v390 = vsub.s32 0, %v389
        %v391 = vrot.slane %v386, %v390
        %v397 = vunpack.c.l.b16 %v382
        %v398 = vunpack.c.l.b16 %v383
        %v399 = vunpack.c.l.b16 %v384
        %v400 = vunpack.c.l.b16 %v385
        %v401 = vpack.c.b16 %v398, %v397
        %v402 = vpack.c.b16 %v400, %v399
        %v406 = vsel %vm352, %v381, 0
        %408 = vmatprep.subr.bf16.mxu0 0
        %409 = vmatpush1.bf16.msra.mxu0 %v401
        %410 = vmatprep.subr.bf16.mxu0 0
        %411 = vmatpush1.bf16.msra.mxu0 %v402
        %412 = vmatprep.subr.bf16.mxu0 0
        %413 = vmatpush1.bf16.msra.mxu0 0
        %414 = vmatprep.subr.bf16.mxu0 0
        %415 = vmatpush1.bf16.msra.mxu0 0
        %416 = vmatprep.subr.bf16.mxu0 0
        %417 = vmatpush1.bf16.msra.mxu0 0
        %418 = vmatprep.subr.bf16.mxu0 0
        %419 = vmatpush1.bf16.msra.mxu0 0
        %420 = vmatprep.subr.bf16.mxu0 0
        %421 = vmatpush1.bf16.msra.mxu0 0
        %422 = vmatprep.subr.bf16.mxu0 0
        %423 = vmatpush1.bf16.msra.mxu0 0
        %424 = vmatprep.subr.bf16.mxu0 0
        %425 = vmatpush1.bf16.msra.mxu0 0
        %426 = vmatprep.subr.bf16.mxu0 0
        %427 = vmatpush1.bf16.msra.mxu0 0
        %428 = vmatprep.subr.bf16.mxu0 0
        %429 = vmatpush1.bf16.msra.mxu0 0
        %430 = vmatprep.subr.bf16.mxu0 0
        %431 = vmatpush1.bf16.msra.mxu0 0
        %432 = vmatprep.subr.bf16.mxu0 0
        %433 = vmatpush1.bf16.msra.mxu0 0
        %434 = vmatprep.subr.bf16.mxu0 0
        %435 = vmatpush1.bf16.msra.mxu0 0
        %436 = vmatprep.subr.bf16.mxu0 0
        %437 = vmatpush1.bf16.msra.mxu0 0
        %438 = vmatprep.subr.bf16.mxu0 0
        %439 = vmatpush1.bf16.msra.mxu0 0
        %440 = vmatprep.mubr.bf16.mxu0 0
        %441 = vmatmul.mubr.bf16.gmra.mrb[0].mxu0 %v406
        %v442 = vpop.f32.mrb[0].mxu0
        %v443 = vadd.f32 %v391, %v442
        %v444 = vpop.f32.mrb[0].mxu0
        %v445 = vpop.f32.mrb[0].mxu0
        %v446 = vpop.f32.mrb[0].mxu0
        %447 = vdwg.mxu0
        %v448 = vmul.f32 %v443, 0.35355338
        %v449 = vpack.c.bf16 %v448, %v448
        %vm450 = vcmask 60416
        %451 = vst.msk [vmem:[%s333] sm:$0xf] %vm450, %v449
        %v452 = vpack.c.bf16 %v443, %v443
        %v454 = vunpack.c.l.b16 %v452
        %v455 = vpack.c.b16 %v454, %v454
        %456 = vrot.lane.b32.xlu0 %v455, 96
        %v457 = vpop.permute.xlu0 %456
        %459 = vst.msk [vmem:[%s340] sm:$0xf] %vm450, %v457
        %460 = vrot.lane.b32.xlu0 %v455, 64
        %v461 = vpop.permute.xlu0 %460
        %463 = vst.msk [vmem:[%s347] sm:$0xf] %vm450, %v461
        %v465 = vunpack.c.l.b16 %v449
        %v466 = vpack.c.b16 %v465, %v465
        %467 = vrot.lane.b32.xlu0 %v466, 120
        %v468 = vpop.permute.xlu0 %467
        %s470 = scalar_lea.vmem %s333, 4 [#allocation7]
        %471 = vst.msk [vmem:[%s470] sm:$0xf] %vm450, %v468
        %472 = vrot.lane.b32.xlu0 %v455, 88
        %v473 = vpop.permute.xlu0 %472
        %s475 = scalar_lea.vmem %s340, 4 [#allocation8]
        %476 = vst.msk [vmem:[%s475] sm:$0xf] %vm450, %v473
        %477 = vrot.lane.b32.xlu0 %v455, 56
        %v478 = vpop.permute.xlu0 %477
        %s480 = scalar_lea.vmem %s347, 4 [#allocation10]
        %481 = vst.msk [vmem:[%s480] sm:$0xf] %vm450, %v478
        %482 = vrot.lane.b32.xlu0 %v466, 112
        %v483 = vpop.permute.xlu0 %482
        %s485 = scalar_lea.vmem %s333, 8 [#allocation7]
        %486 = vst.msk [vmem:[%s485] sm:$0xf] %vm450, %v483
        %487 = vrot.lane.b32.xlu0 %v455, 80
        %v488 = vpop.permute.xlu0 %487
        %s490 = scalar_lea.vmem %s340, 8 [#allocation8]
        %491 = vst.msk [vmem:[%s490] sm:$0xf] %vm450, %v488
        %492 = vrot.lane.b32.xlu0 %v455, 48
        %v493 = vpop.permute.xlu0 %492
        %s495 = scalar_lea.vmem %s347, 8 [#allocation10]
        %496 = vst.msk [vmem:[%s495] sm:$0xf] %vm450, %v493
        %497 = vrot.lane.b32.xlu0 %v466, 104
        %v498 = vpop.permute.xlu0 %497
        %s500 = scalar_lea.vmem %s333, 12 [#allocation7]
        %501 = vst.msk [vmem:[%s500] sm:$0xf] %vm450, %v498
        %502 = vrot.lane.b32.xlu0 %v455, 72
        %v503 = vpop.permute.xlu0 %502
        %s505 = scalar_lea.vmem %s340, 12 [#allocation8]
        %506 = vst.msk [vmem:[%s505] sm:$0xf] %vm450, %v503
        %507 = vrot.lane.b32.xlu0 %v455, 40
        %v508 = vpop.permute.xlu0 %507
        %s510 = scalar_lea.vmem %s347, 12 [#allocation10]
        %511 = vst.msk [vmem:[%s510] sm:$0xf] %vm450, %v508
        %s512 = sand.u32 %s163, 1
        %s513 = scalar_lea.sflag [#allocation4], %s512
        %s514 = sand.u32 %s163, 1
        %s515 = smul.addr %s514, 16
        %s516 = scalar_lea.vmem [#allocation7], %s515
        %s517 = sand.u32 %s29, 1
        %s518 = scalar_lea.sflag [#allocation9], %s517
        %s519 = sand.u32 %s191, 1
        %s520 = smul.addr %s519, 16
        %s521 = scalar_lea.vmem [#allocation8], %s520
        %s522 = sand.u32 %s29, 1
        %s523 = scalar_lea.sflag [#allocation9], %s522
        %s524 = sand.u32 %s219, 1
        %s525 = smul.addr %s524, 16
        %s526 = scalar_lea.vmem [#allocation10], %s525
        // Predicated region
        $region49: #{tpu_custom_call.1} parent=39 // pred_check
          %p527 = pneg %p173
        $region50: #{tpu_custom_call.1} parent=39 // pred_check_branch
          %529 = sbr.rel (%p527) target = $region52
        $region51: #{tpu_custom_call.1} parent=39 // pred_region
          %s531 = ssub.s32 256, 256
          %532 = vsyncadd %s513, %s531
          %s533 = smul.addr %s33, 4
          %s534 = sadd.s32 %s34, %s533
          %s535 = smul.addr %s534, 64
          %s536 = scalar_lea.hbm %s5, %s535
          %s537 = sshll.u32 %s516, 4
          %s538 = int_to_ptr.vmem [resolvable:$true] %s537
          %543 = dma.vmem_to_hbm [thread:$0]  %s538, 256, %s536, %s513, 64, 64, 4
        $region52: #{tpu_custom_call.1} parent=39 // pred_fallthru
          _
        // Predicated region
        $region53: #{tpu_custom_call.1} parent=39 // pred_check
          %p544 = pneg %p201
        $region54: #{tpu_custom_call.1} parent=39 // pred_check_branch
          %546 = sbr.rel (%p544) target = $region56
        $region55: #{tpu_custom_call.1} parent=39 // pred_region
          %s548 = ssub.s32 256, 256
          %549 = vsyncadd %s518, %s548
          %s550 = smul.addr %s33, 4
          %s551 = sadd.s32 %s34, %s550
          %s552 = smul.addr %s551, 64
          %s553 = scalar_lea.hbm %s6, %s552
          %s554 = sshll.u32 %s521, 4
          %s555 = int_to_ptr.vmem [resolvable:$true] %s554
          %560 = dma.vmem_to_hbm [thread:$0]  %s555, 256, %s553, %s518, 64, 64, 4
        $region56: #{tpu_custom_call.1} parent=39 // pred_fallthru
          _
        // Predicated region
        $region57: #{tpu_custom_call.1} parent=39 // pred_check
          %p561 = pneg %p229
        $region58: #{tpu_custom_call.1} parent=39 // pred_check_branch
          %563 = sbr.rel (%p561) target = $region60
        $region59: #{tpu_custom_call.1} parent=39 // pred_region
          %s565 = ssub.s32 256, 256
          %566 = vsyncadd %s523, %s565
          %s567 = smul.addr %s33, 4
          %s568 = sadd.s32 %s34, %s567
          %s569 = smul.addr %s568, 64
          %s570 = scalar_lea.hbm %s7, %s569
          %s571 = sshll.u32 %s526, 4
          %s572 = int_to_ptr.vmem [resolvable:$true] %s571
          %577 = dma.vmem_to_hbm [thread:$0]  %s572, 256, %s570, %s523, 64, 64, 4
        $region60: #{tpu_custom_call.1} parent=39 // pred_fallthru
          _
      $region40: #{tpu_custom_call.1} parent=5 // pred_fallthru
        _
      %p578 = scmp.le.s32.totalorder 2, %s24
      // Predicated region
      $region61: #{tpu_custom_call.1} parent=5 // pred_check
        %p579 = pneg %p578
      $region62: #{tpu_custom_call.1} parent=5 // pred_check_branch
        %581 = sbr.rel (%p579) target = $region64
      $region63: #{tpu_custom_call.1} parent=5 // pred_region
        %s582 = ssub.s32 %s24, 2
        // Predicated region
        $region65: #{tpu_custom_call.1} parent=63 // pred_check
          %p583 = pneg %p179
        $region66: #{tpu_custom_call.1} parent=63 // pred_check_branch
          %585 = sbr.rel (%p583) target = $region68
        $region67: #{tpu_custom_call.1} parent=63 // pred_region
          %s586 = sand.u32 %s164, 1
          %s587 = scalar_lea.sflag [#allocation4], %s586
          %s588 = sand.u32 %s164, 1
          %s589 = smul.addr %s588, 16
          %s590 = scalar_lea.vmem [#allocation7], %s589
          %591 = dma.done %s587, 256
        $region68: #{tpu_custom_call.1} parent=63 // pred_fallthru
          _
        // Predicated region
        $region69: #{tpu_custom_call.1} parent=63 // pred_check
          %p592 = pneg %p207
        $region70: #{tpu_custom_call.1} parent=63 // pred_check_branch
          %594 = sbr.rel (%p592) target = $region72
        $region71: #{tpu_custom_call.1} parent=63 // pred_region
          %s595 = sand.u32 %s30, 1
          %s596 = scalar_lea.sflag [#allocation9], %s595
          %s597 = sand.u32 %s192, 1
          %s598 = smul.addr %s597, 16
          %s599 = scalar_lea.vmem [#allocation8], %s598
          %600 = dma.done %s596, 256
        $region72: #{tpu_custom_call.1} parent=63 // pred_fallthru
          _
        // Predicated region
        $region73: #{tpu_custom_call.1} parent=63 // pred_check
          %p601 = pneg %p235
        $region74: #{tpu_custom_call.1} parent=63 // pred_check_branch
          %603 = sbr.rel (%p601) target = $region76
        $region75: #{tpu_custom_call.1} parent=63 // pred_region
          %s604 = sand.u32 %s30, 1
          %s605 = scalar_lea.sflag [#allocation9], %s604
          %s606 = sand.u32 %s220, 1
          %s607 = smul.addr %s606, 16
          %s608 = scalar_lea.vmem [#allocation10], %s607
          %609 = dma.done %s605, 256
        $region76: #{tpu_custom_call.1} parent=63 // pred_fallthru
          _
      $region64: #{tpu_custom_call.1} parent=5 // pred_fallthru
        _
    $region6: #{tpu_custom_call.1} parent=1 // loop_footer
      %s28 = sadd.s32 1, %s24
    $region7: #{tpu_custom_call.1} parent=1 // loop_footer_branch
      %23 = sbr.rel target = $region3
    $region8: #{tpu_custom_call.1} parent=1 // loop_exit
      _
    %610 = vsyncpa [#allocation3], 1
    %s611 = scalar_lea.sflag [#allocation3], 1
    %612 = vsyncpa %s611, 1
    %613 = vsyncpa [#allocation6], 1
    %614 = vsyncpa [#allocation4], 1
    %s615 = scalar_lea.sflag [#allocation4], 1
    %616 = vsyncpa %s615, 1
    %617 = vsyncpa [#allocation9], 1
    %s618 = scalar_lea.sflag [#allocation9], 1
    %619 = vsyncpa %s618, 1

// kernel: tpu_custom_call.1
$region0: #{tpu_custom_call.1}
  #allocation0 [shape = 'u32[]', space=smem, size = 0x4, offset = 0x4, fixed_abs, tag = 'smem constant byte address 0x4 - core index']
  #allocation1 [shape = 'u32[144,128]{1,0:T(1,128)}', space=vmem, size = 0x12000, scoped, tag = 'internal scratch']
  %s0 = inlined_call_operand.hbm [shape: f32[2,8,32], index: 0, kind: input, shape index: {}]
  %s1 = inlined_call_operand.vmem [shape: f32[1,32], index: 1, kind: input, shape index: {}]
  %s2 = inlined_call_operand.vmem [shape: f32[1,32], index: 2, kind: input, shape index: {}]
  %s3 = inlined_call_operand.hbm [shape: bf16[32,96], index: 3, kind: input, shape index: {}]
  %s4 = inlined_call_operand.vmem [shape: f32[1,96], index: 4, kind: input, shape index: {}]
  %s5 = inlined_call_operand.hbm [shape: bf16[2,4,8,8], index: 5, kind: output, shape index: {0}]
  %s6 = inlined_call_operand.hbm [shape: bf16[2,4,8,8], index: 6, kind: output, shape index: {1}]
  %s7 = inlined_call_operand.hbm [shape: bf16[2,4,8,8], index: 7, kind: output, shape index: {2}]
  %8 = xla_tuple %s5, %s6, %s7
  %s9 = sld [smem:[#allocation0]]
  $region77: #{tpu_custom_call.1} parent=0
    _
  %s11 = ssub.s32 1, %s9
  %s12 = scalar_select 0, %s11, %s9
  $region1: #{tpu_custom_call.1} parent=0
    #allocation2 [shape = 'u8[8192]{0}', space=vmem, size = 0x2000, scoped, tag = 'input window, operand 0']
    #allocation3 [shape = 's32[2]{0}', space=sflag, size = 0x8, scoped, tag = 'scoped memory for tpu_custom_call.1']
    #allocation4 [shape = 's32[2]{0}', space=sflag, size = 0x8, scoped, tag = 'scoped memory for tpu_custom_call.1']
    #allocation5 [shape = 'u8[8192]{0}', space=vmem, size = 0x2000, scoped, tag = 'input window, operand 3, single buffered']
    #allocation6 [shape = 's32[1]{0}', space=sflag, size = 0x4, scoped, tag = 'scoped memory for tpu_custom_call.1']
    #allocation7 [shape = 'u8[16384]{0}', space=vmem, size = 0x4000, scoped, tag = 'output window, operand 0']
    #allocation8 [shape = 'u8[16384]{0}', space=vmem, size = 0x4000, scoped, tag = 'output window, operand 1']
    #allocation9 [shape = 's32[2]{0}', space=sflag, size = 0x8, scoped, tag = 'scoped memory for tpu_custom_call.1']
    #allocation10 [shape = 'u8[16384]{0}', space=vmem, size = 0x4000, scoped, tag = 'output window, operand 2']
    %13 = vsyncpa [#allocation3], 0
    %s14 = scalar_lea.sflag [#allocation3], 1
    %15 = vsyncpa %s14, 0
    %16 = vsyncpa [#allocation6], 0
    %17 = vsyncpa [#allocation4], 0
    %s18 = scalar_lea.sflag [#allocation4], 1
    %19 = vsyncpa %s18, 0
    %20 = vsyncpa [#allocation9], 0
    %s21 = scalar_lea.sflag [#allocation9], 1
    %22 = vsyncpa %s21, 0
    loop: start=0, step=1, limit=4
    $region2: #{tpu_custom_call.1} parent=1 // loop_pre_header
      _
    $region3: #{tpu_custom_call.1} parent=1 // loop_header
      %s24 = sphi 0, %s28
      %p25 = scmp.ge.s32.totalorder %s24, 4
      %s31 = sphi 0, %s43
      %s32 = sphi 0, %s39
      %s33 = sphi 0, %s31
      %s34 = sphi 0, %s32
      %s35 = sphi 0, %s33
      %s36 = sphi 0, %s34
      %s48 = sphi 0, %s50
      %s51 = sphi 0, %s48
      %s52 = sphi 0, %s51
      %s68 = sphi 0, %s52
      %s72 = sphi 0, %s72
      %s74 = sphi 0, %s72
      %s75 = sphi 0, %s74
      %s89 = sphi 0, %s75
      %s93 = sphi 0, %s93
      %s95 = sphi 0, %s93
      %s96 = sphi 0, %s95
      %s110 = sphi 0, %s96
      %s114 = sphi 0, %s114
      %s116 = sphi 0, %s114
      %s117 = sphi 0, %s116
      %s131 = sphi 0, %s117
      %s135 = sphi 0, %s135
      %s137 = sphi 0, %s135
      %s138 = sphi 0, %s137
      %s152 = sphi 0, %s138
      %s160 = sphi 0, %s162
      %s163 = sphi 0, %s160
      %s164 = sphi 0, %s163
      %s180 = sphi 0, %s164
      %s188 = sphi 0, %s190
      %s191 = sphi 0, %s188
      %s192 = sphi 0, %s191
      %s208 = sphi 0, %s192
      %s216 = sphi 0, %s218
      %s219 = sphi 0, %s216
      %s220 = sphi 0, %s219
      %s236 = sphi 0, %s220
    $region4: #{tpu_custom_call.1} parent=1 // loop_header_branch
      %27 = sbr.rel (%p25) target = $region8
    $region5: #{tpu_custom_call.1} parent=1 // loop_body
      %s29 = ssub.s32 %s24, 1
      %s30 = ssub.s32 %s24, 2
      %s37 = sadd.s32 1, %s32
      %p38 = scmp.ge.s32.totalorder %s37, 1
      %s39 = scalar_select %p38, 0, %s37
      %s40 = sadd.s32 1, %s31
      %s41 = scalar_select %p38, %s40, %s31
      %p42 = scmp.ge.s32.totalorder %s41, 2
      %s43 = scalar_select %p42, 0, %s41
      %s44 = ssub.s32 %s31, %s43
      %s45 = ssub.s32 %s32, %s39
      %s46 = sor.u32 %s44, %s45
      %p47 = scmp.eq.s32.totalorder %s46, 0
      %s49 = sadd.s32 %s48, 1
      %s50 = scalar_select %p47, %s48, %s49
      %p53 = pneg %p47
      %p54 = scmp.eq.s32.totalorder %s24, 1
      %p55 = por %p53, %p54
      %p56 = scmp.ne.s32.totalorder %s48, %s51
      %p57 = scmp.eq.s32.totalorder %s24, 0
      %p58 = por %p56, %p57
      %p59 = scmp.ne.s32.totalorder %s48, %s51
      %p60 = scmp.eq.s32.totalorder %s29, 1
      %p61 = por %p59, %p60
      %p62 = scmp.ne.s32.totalorder %s51, %s52
      %p63 = scmp.eq.s32.totalorder %s29, 0
      %p64 = por %p62, %p63
      %p65 = scmp.ne.s32.totalorder %s51, %s52
      %p66 = scmp.eq.s32.totalorder %s30, 1
      %p67 = por %p65, %p66
      %p69 = scmp.ne.s32.totalorder %s52, %s68
      %p70 = scmp.eq.s32.totalorder %s30, 0
      %p71 = por %p69, %p70
      %s73 = sadd.s32 %s72, 1
      %p76 = scmp.eq.s32.totalorder %s24, 1
      %p77 = scmp.ne.s32.totalorder %s72, %s74
      %p78 = scmp.eq.s32.totalorder %s24, 0
      %p79 = por %p77, %p78
      %p80 = scmp.ne.s32.totalorder %s72, %s74
      %p81 = scmp.eq.s32.totalorder %s29, 1
      %p82 = por %p80, %p81
      %p83 = scmp.ne.s32.totalorder %s74, %s75
      %p84 = scmp.eq.s32.totalorder %s29, 0
      %p85 = por %p83, %p84
      %p86 = scmp.ne.s32.totalorder %s74, %s75
      %p87 = scmp.eq.s32.totalorder %s30, 1
      %p88 = por %p86, %p87
      %p90 = scmp.ne.s32.totalorder %s75, %s89
      %p91 = scmp.eq.s32.totalorder %s30, 0
      %p92 = por %p90, %p91
      %s94 = sadd.s32 %s93, 1
      %p97 = scmp.eq.s32.totalorder %s24, 1
      %p98 = scmp.ne.s32.totalorder %s93, %s95
      %p99 = scmp.eq.s32.totalorder %s24, 0
      %p100 = por %p98, %p99
      %p101 = scmp.ne.s32.totalorder %s93, %s95
      %p102 = scmp.eq.s32.totalorder %s29, 1
      %p103 = por %p101, %p102
      %p104 = scmp.ne.s32.totalorder %s95, %s96
      %p105 = scmp.eq.s32.totalorder %s29, 0
      %p106 = por %p104, %p105
      %p107 = scmp.ne.s32.totalorder %s95, %s96
      %p108 = scmp.eq.s32.totalorder %s30, 1
      %p109 = por %p107, %p108
      %p111 = scmp.ne.s32.totalorder %s96, %s110
      %p112 = scmp.eq.s32.totalorder %s30, 0
      %p113 = por %p111, %p112
      %s115 = sadd.s32 %s114, 1
      %p118 = scmp.eq.s32.totalorder %s24, 1
      %p119 = scmp.ne.s32.totalorder %s114, %s116
      %p120 = scmp.eq.s32.totalorder %s24, 0
      %p121 = por %p119, %p120
      %p122 = scmp.ne.s32.totalorder %s114, %s116
      %p123 = scmp.eq.s32.totalorder %s29, 1
      %p124 = por %p122, %p123
      %p125 = scmp.ne.s32.totalorder %s116, %s117
      %p126 = scmp.eq.s32.totalorder %s29, 0
      %p127 = por %p125, %p126
      %p128 = scmp.ne.s32.totalorder %s116, %s117
      %p129 = scmp.eq.s32.totalorder %s30, 1
      %p130 = por %p128, %p129
      %p132 = scmp.ne.s32.totalorder %s117, %s131
      %p133 = scmp.eq.s32.totalorder %s30, 0
      %p134 = por %p132, %p133
      %s136 = sadd.s32 %s135, 1
      %p139 = scmp.eq.s32.totalorder %s24, 1
      %p140 = scmp.ne.s32.totalorder %s135, %s137
      %p141 = scmp.eq.s32.totalorder %s24, 0
      %p142 = por %p140, %p141
      %p143 = scmp.ne.s32.totalorder %s135, %s137
      %p144 = scmp.eq.s32.totalorder %s29, 1
      %p145 = por %p143, %p144
      %p146 = scmp.ne.s32.totalorder %s137, %s138
      %p147 = scmp.eq.s32.totalorder %s29, 0
      %p148 = por %p146, %p147
      %p149 = scmp.ne.s32.totalorder %s137, %s138
      %p150 = scmp.eq.s32.totalorder %s30, 1
      %p151 = por %p149, %p150
      %p153 = scmp.ne.s32.totalorder %s138, %s152
      %p154 = scmp.eq.s32.totalorder %s30, 0
      %p155 = por %p153, %p154
      %s156 = ssub.s32 %s31, %s43
      %s157 = ssub.s32 %s32, %s39
      %s158 = sor.u32 %s156, %s157
      %p159 = scmp.eq.s32.totalorder %s158, 0
      %s161 = sadd.s32 %s160, 1
      %s162 = scalar_select %p159, %s160, %s161
      %p165 = pneg %p159
      %p166 = scmp.eq.s32.totalorder %s24, 1
      %p167 = por %p165, %p166
      %p168 = scmp.ne.s32.totalorder %s160, %s163
      %p169 = scmp.eq.s32.totalorder %s24, 0
      %p170 = por %p168, %p169
      %p171 = scmp.ne.s32.totalorder %s160, %s163
      %p172 = scmp.eq.s32.totalorder %s29, 1
      %p173 = por %p171, %p172
      %p174 = scmp.ne.s32.totalorder %s163, %s164
      %p175 = scmp.eq.s32.totalorder %s29, 0
      %p176 = por %p174, %p175
      %p177 = scmp.ne.s32.totalorder %s163, %s164
      %p178 = scmp.eq.s32.totalorder %s30, 1
      %p179 = por %p177, %p178
      %p181 = scmp.ne.s32.totalorder %s164, %s180
      %p182 = scmp.eq.s32.totalorder %s30, 0
      %p183 = por %p181, %p182
      %s184 = ssub.s32 %s31, %s43
      %s185 = ssub.s32 %s32, %s39
      %s186 = sor.u32 %s184, %s185
      %p187 = scmp.eq.s32.totalorder %s186, 0
      %s189 = sadd.s32 %s188, 1
      %s190 = scalar_select %p187, %s188, %s189
      %p193 = pneg %p187
      %p194 = scmp.eq.s32.totalorder %s24, 1
      %p195 = por %p193, %p194
      %p196 = scmp.ne.s32.totalorder %s188, %s191
      %p197 = scmp.eq.s32.totalorder %s24, 0
      %p198 = por %p196, %p197
      %p199 = scmp.ne.s32.totalorder %s188, %s191
      %p200 = scmp.eq.s32.totalorder %s29, 1
      %p201 = por %p199, %p200
      %p202 = scmp.ne.s32.totalorder %s191, %s192
      %p203 = scmp.eq.s32.totalorder %s29, 0
      %p204 = por %p202, %p203
      %p205 = scmp.ne.s32.totalorder %s191, %s192
      %p206 = scmp.eq.s32.totalorder %s30, 1
      %p207 = por %p205, %p206
      %p209 = scmp.ne.s32.totalorder %s192, %s208
      %p210 = scmp.eq.s32.totalorder %s30, 0
      %p211 = por %p209, %p210
      %s212 = ssub.s32 %s31, %s43
      %s213 = ssub.s32 %s32, %s39
      %s214 = sor.u32 %s212, %s213
      %p215 = scmp.eq.s32.totalorder %s214, 0
      %s217 = sadd.s32 %s216, 1
      %s218 = scalar_select %p215, %s216, %s217
      %p221 = pneg %p215
      %p222 = scmp.eq.s32.totalorder %s24, 1
      %p223 = por %p221, %p222
      %p224 = scmp.ne.s32.totalorder %s216, %s219
      %p225 = scmp.eq.s32.totalorder %s24, 0
      %p226 = por %p224, %p225
      %p227 = scmp.ne.s32.totalorder %s216, %s219
      %p228 = scmp.eq.s32.totalorder %s29, 1
      %p229 = por %p227, %p228
      %p230 = scmp.ne.s32.totalorder %s219, %s220
      %p231 = scmp.eq.s32.totalorder %s29, 0
      %p232 = por %p230, %p231
      %p233 = scmp.ne.s32.totalorder %s219, %s220
      %p234 = scmp.eq.s32.totalorder %s30, 1
      %p235 = por %p233, %p234
      %p237 = scmp.ne.s32.totalorder %s220, %s236
      %p238 = scmp.eq.s32.totalorder %s30, 0
      %p239 = por %p237, %p238
      %p240 = scmp.le.s32.totalorder 1, %s24
      %p241 = scmp.lt.s32.totalorder %s24, 3
      %p242 = pnand %p240, %p241
      %p243 = pneg %p242
      // Predicated region
      $region9: #{tpu_custom_call.1} parent=5 // pred_check
        _
      $region10: #{tpu_custom_call.1} parent=5 // pred_check_branch
        %245 = sbr.rel (%p242) target = $region12
      $region11: #{tpu_custom_call.1} parent=5 // pred_region
        %s246 = ssub.s32 %s24, 1
        // Predicated region
        $region13: #{tpu_custom_call.1} parent=11 // pred_check
          %p247 = pneg %p85
        $region14: #{tpu_custom_call.1} parent=11 // pred_check_branch
          %249 = sbr.rel (%p247) target = $region16
        $region15: #{tpu_custom_call.1} parent=11 // pred_region
          _
        $region16: #{tpu_custom_call.1} parent=11 // pred_fallthru
          _
        // Predicated region
        $region17: #{tpu_custom_call.1} parent=11 // pred_check
          %p250 = pneg %p106
        $region18: #{tpu_custom_call.1} parent=11 // pred_check_branch
          %252 = sbr.rel (%p250) target = $region20
        $region19: #{tpu_custom_call.1} parent=11 // pred_region
          _
        $region20: #{tpu_custom_call.1} parent=11 // pred_fallthru
          _
        // Predicated region
        $region21: #{tpu_custom_call.1} parent=11 // pred_check
          %p253 = pneg %p127
        $region22: #{tpu_custom_call.1} parent=11 // pred_check_branch
          %255 = sbr.rel (%p253) target = $region24
        $region23: #{tpu_custom_call.1} parent=11 // pred_region
          %s257 = ssub.s32 256, 256
          %258 = vsyncadd [#allocation6], %s257
          %s259 = sshll.u32 [#allocation5], 4
          %s260 = int_to_ptr.vmem [resolvable:$true] %s259
          %265 = dma.hbm_to_vmem [thread:$0]  %s3, 256, %s260, [#allocation6], 64, 64, 4
        $region24: #{tpu_custom_call.1} parent=11 // pred_fallthru
          _
        // Predicated region
        $region25: #{tpu_custom_call.1} parent=11 // pred_check
          %p266 = pneg %p148
        $region26: #{tpu_custom_call.1} parent=11 // pred_check_branch
          %268 = sbr.rel (%p266) target = $region28
        $region27: #{tpu_custom_call.1} parent=11 // pred_region
          _
        $region28: #{tpu_custom_call.1} parent=11 // pred_fallthru
          _
      $region12: #{tpu_custom_call.1} parent=5 // pred_fallthru
        _
      %p269 = scmp.lt.s32.totalorder %s24, 2
      // Predicated region
      $region29: #{tpu_custom_call.1} parent=5 // pred_check
        %p270 = pneg %p269
      $region30: #{tpu_custom_call.1} parent=5 // pred_check_branch
        %272 = sbr.rel (%p270) target = $region32
      $region31: #{tpu_custom_call.1} parent=5 // pred_region
        // Predicated region
        $region33: #{tpu_custom_call.1} parent=31 // pred_check
          %p273 = pneg %p58
        $region34: #{tpu_custom_call.1} parent=31 // pred_check_branch
          %275 = sbr.rel (%p273) target = $region36
        $region35: #{tpu_custom_call.1} parent=31 // pred_region
          %s276 = sand.u32 %s48, 1
          %s277 = scalar_lea.sflag [#allocation3], %s276
          %s278 = sand.u32 %s48, 1
          %s279 = smul.addr %s278, 8
          %s280 = scalar_lea.vmem [#allocation2], %s279
          %s282 = ssub.s32 128, 128
          %283 = vsyncadd %s277, %s282
          %s284 = sadd.s32 %s32, %s31
          %s285 = smul.addr %s284, 128
          %s286 = scalar_lea.hbm %s0, %s285
          %s288 = sshll.u32 %s280, 4
          %s289 = int_to_ptr.vmem [resolvable:$true] %s288
          %291 = dma.hbm_to_vmem [thread:$0]  %s286, 128, %s289, %s277
        $region36: #{tpu_custom_call.1} parent=31 // pred_fallthru
          _
      $region32: #{tpu_custom_call.1} parent=5 // pred_fallthru
        _
      %p292 = scmp.le.s32.totalorder 1, %s24
      %p293 = scmp.lt.s32.totalorder %s24, 3
      %p294 = pnand %p292, %p293
      %p295 = pneg %p294
      // Predicated region
      $region37: #{tpu_custom_call.1} parent=5 // pred_check
        _
      $region38: #{tpu_custom_call.1} parent=5 // pred_check_branch
        %297 = sbr.rel (%p294) target = $region40
      $region39: #{tpu_custom_call.1} parent=5 // pred_region
        %s298 = ssub.s32 %s24, 1
        %s299 = sand.u32 %s51, 1
        %s300 = scalar_lea.sflag [#allocation3], %s299
        %s301 = sand.u32 %s51, 1
        %s302 = smul.addr %s301, 8
        %s303 = scalar_lea.vmem [#allocation2], %s302
        // Predicated region
        $region41: #{tpu_custom_call.1} parent=39 // pred_check
          %p304 = pneg %p64
        $region42: #{tpu_custom_call.1} parent=39 // pred_check_branch
          %306 = sbr.rel (%p304) target = $region44
        $region43: #{tpu_custom_call.1} parent=39 // pred_region
          %307 = dma.done %s300, 128
        $region44: #{tpu_custom_call.1} parent=39 // pred_fallthru
          _
        // Predicated region
        $region45: #{tpu_custom_call.1} parent=39 // pred_check
          %p308 = pneg %p127
        $region46: #{tpu_custom_call.1} parent=39 // pred_check_branch
          %310 = sbr.rel (%p308) target = $region48
        $region47: #{tpu_custom_call.1} parent=39 // pred_region
          %311 = dma.done [#allocation6], 256
        $region48: #{tpu_custom_call.1} parent=39 // pred_fallthru
          _
        %s312 = sand.u32 %s51, 1
        %s313 = scalar_lea.sflag [#allocation3], %s312
        %s314 = sand.u32 %s51, 1
        %s315 = smul.addr %s314, 8
        %s316 = scalar_lea.vmem [#allocation2], %s315
        %p317 = pneg %p64
        %p318 = pneg %p61
        %p319 = pneg %p85
        %p320 = pneg %p82
        %p321 = pneg %p106
        %p322 = pneg %p103
        %p323 = pneg %p127
        %p324 = pneg %p124
        %p325 = pneg %p148
        %p326 = pneg %p145
        %p327 = pneg %p176
        %p328 = pneg %p173
        %s329 = sand.u32 %s163, 1
        %s330 = scalar_lea.sflag [#allocation4], %s329
        %s331 = sand.u32 %s163, 1
        %s332 = smul.addr %s331, 16
        %s333 = scalar_lea.vmem [#allocation7], %s332
        %p334 = pneg %p204
        %p335 = pneg %p201
        %s336 = sand.u32 %s29, 1
        %s337 = scalar_lea.sflag [#allocation9], %s336
        %s338 = sand.u32 %s191, 1
        %s339 = smul.addr %s338, 16
        %s340 = scalar_lea.vmem [#allocation8], %s339
        %p341 = pneg %p232
        %p342 = pneg %p229
        %s343 = sand.u32 %s29, 1
        %s344 = scalar_lea.sflag [#allocation9], %s343
        %s345 = sand.u32 %s219, 1
        %s346 = smul.addr %s345, 16
        %s347 = scalar_lea.vmem [#allocation10], %s346
        %v349 = vld [vmem:[%s303] sm:$0xff]
        %v350 = vld [vmem:[%s1] sm:$0x1]
        %v351 = vld [vmem:[%s2] sm:$0x1]
        %vm352 = vcmask 261120
        %v353 = vsel %vm352, %v349, 0.0
        %354 = vadd.xlane.f32.xlu0 %v353
        %v355 = vpop.xlane.xlu0 %354
        %v356 = vrcp.pop 32.0
        %v357 = vmul.f32 %v355, %v356
        %v358 = vsub.f32 %v349, %v357
        %v359 = vmul.f32 %v358, %v358
        %v360 = vsel %vm352, %v359, 0.0
        %361 = vadd.xlane.f32.xlu0 %v360
        %v362 = vpop.xlane.xlu0 %361
        %v363 = vmul.f32 %v362, %v356
        %v364 = vadd.f32 %v363, 1e-05
        %v365 = vrsqrt.pop %v364
        %v366 = vmul.f32 %v358, %v365
        %v368 = vlaneseq
        %v369 = vshrl.u32 %v368, 7
        %v370 = vsub.s32 0, %v369
        %v371 = vrot.slane %v350, %v370
        %v373 = vmul.f32 %v366, %v371
        %v375 = vlaneseq
        %v376 = vshrl.u32 %v375, 7
        %v377 = vsub.s32 0, %v376
        %v378 = vrot.slane %v351, %v377
        %v380 = vadd.f32 %v373, %v378
        %v381 = vpack.c.bf16 %v380, %v380
        %v382 = vld [vmem:[#allocation5] sm:$0xf]
        %v383 = vld [vmem:[#allocation5 + $0x4] sm:$0xf]
        %v384 = vld [vmem:[#allocation5 + $0x8] sm:$0xf]
        %v385 = vld [vmem:[#allocation5 + $0xc] sm:$0xf]
        %v386 = vld [vmem:[%s4] sm:$0x1]
        %v388 = vlaneseq
        %v389 = vshrl.u32 %v388, 7
        %v390 = vsub.s32 0, %v389
        %v391 = vrot.slane %v386, %v390
        %v397 = vunpack.c.l.b16 %v382
        %v398 = vunpack.c.l.b16 %v383
        %v399 = vunpack.c.l.b16 %v384
        %v400 = vunpack.c.l.b16 %v385
        %v401 = vpack.c.b16 %v398, %v397
        %v402 = vpack.c.b16 %v400, %v399
        %v406 = vsel %vm352, %v381, 0
        %408 = vmatprep.subr.bf16.mxu0 0
        %409 = vmatpush1.bf16.msra.mxu0 %v401
        %410 = vmatprep.subr.bf16.mxu0 0
        %411 = vmatpush1.bf16.msra.mxu0 %v402
        %412 = vmatprep.subr.bf16.mxu0 0
        %413 = vmatpush1.bf16.msra.mxu0 0
        %414 = vmatprep.subr.bf16.mxu0 0
        %415 = vmatpush1.bf16.msra.mxu0 0
        %416 = vmatprep.subr.bf16.mxu0 0
        %417 = vmatpush1.bf16.msra.mxu0 0
        %418 = vmatprep.subr.bf16.mxu0 0
        %419 = vmatpush1.bf16.msra.mxu0 0
        %420 = vmatprep.subr.bf16.mxu0 0
        %421 = vmatpush1.bf16.msra.mxu0 0
        %422 = vmatprep.subr.bf16.mxu0 0
        %423 = vmatpush1.bf16.msra.mxu0 0
        %424 = vmatprep.subr.bf16.mxu0 0
        %425 = vmatpush1.bf16.msra.mxu0 0
        %426 = vmatprep.subr.bf16.mxu0 0
        %427 = vmatpush1.bf16.msra.mxu0 0
        %428 = vmatprep.subr.bf16.mxu0 0
        %429 = vmatpush1.bf16.msra.mxu0 0
        %430 = vmatprep.subr.bf16.mxu0 0
        %431 = vmatpush1.bf16.msra.mxu0 0
        %432 = vmatprep.subr.bf16.mxu0 0
        %433 = vmatpush1.bf16.msra.mxu0 0
        %434 = vmatprep.subr.bf16.mxu0 0
        %435 = vmatpush1.bf16.msra.mxu0 0
        %436 = vmatprep.subr.bf16.mxu0 0
        %437 = vmatpush1.bf16.msra.mxu0 0
        %438 = vmatprep.subr.bf16.mxu0 0
        %439 = vmatpush1.bf16.msra.mxu0 0
        %440 = vmatprep.mubr.bf16.mxu0 0
        %441 = vmatmul.mubr.bf16.gmra.mrb[0].mxu0 %v406
        %v442 = vpop.f32.mrb[0].mxu0
        %v443 = vadd.f32 %v391, %v442
        %v444 = vpop.f32.mrb[0].mxu0
        %v445 = vpop.f32.mrb[0].mxu0
        %v446 = vpop.f32.mrb[0].mxu0
        %447 = vdwg.mxu0
        %v448 = vmul.f32 %v443, 0.35355338
        %v449 = vpack.c.bf16 %v448, %v448
        %vm450 = vcmask 60416
        %451 = vst.msk [vmem:[%s333] sm:$0xf] %vm450, %v449
        %v452 = vpack.c.bf16 %v443, %v443
        %v454 = vunpack.c.l.b16 %v452
        %v455 = vpack.c.b16 %v454, %v454
        %456 = vrot.lane.b32.xlu0 %v455, 96
        %v457 = vpop.permute.xlu0 %456
        %459 = vst.msk [vmem:[%s340] sm:$0xf] %vm450, %v457
        %460 = vrot.lane.b32.xlu0 %v455, 64
        %v461 = vpop.permute.xlu0 %460
        %463 = vst.msk [vmem:[%s347] sm:$0xf] %vm450, %v461
        %v465 = vunpack.c.l.b16 %v449
        %v466 = vpack.c.b16 %v465, %v465
        %467 = vrot.lane.b32.xlu0 %v466, 120
        %v468 = vpop.permute.xlu0 %467
        %s470 = scalar_lea.vmem %s333, 4 [#allocation7]
        %471 = vst.msk [vmem:[%s470] sm:$0xf] %vm450, %v468
        %472 = vrot.lane.b32.xlu0 %v455, 88
        %v473 = vpop.permute.xlu0 %472
        %s475 = scalar_lea.vmem %s340, 4 [#allocation8]
        %476 = vst.msk [vmem:[%s475] sm:$0xf] %vm450, %v473
        %477 = vrot.lane.b32.xlu0 %v455, 56
        %v478 = vpop.permute.xlu0 %477
        %s480 = scalar_lea.vmem %s347, 4 [#allocation10]
        %481 = vst.msk [vmem:[%s480] sm:$0xf] %vm450, %v478
        %482 = vrot.lane.b32.xlu0 %v466, 112
        %v483 = vpop.permute.xlu0 %482
        %s485 = scalar_lea.vmem %s333, 8 [#allocation7]
        %486 = vst.msk [vmem:[%s485] sm:$0xf] %vm450, %v483
        %487 = vrot.lane.b32.xlu0 %v455, 80
        %v488 = vpop.permute.xlu0 %487
        %s490 = scalar_lea.vmem %s340, 8 [#allocation8]
        %491 = vst.msk [vmem:[%s490] sm:$0xf] %vm450, %v488
        %492 = vrot.lane.b32.xlu0 %v455, 48
        %v493 = vpop.permute.xlu0 %492
        %s495 = scalar_lea.vmem %s347, 8 [#allocation10]
        %496 = vst.msk [vmem:[%s495] sm:$0xf] %vm450, %v493
        %497 = vrot.lane.b32.xlu0 %v466, 104
        %v498 = vpop.permute.xlu0 %497
        %s500 = scalar_lea.vmem %s333, 12 [#allocation7]
        %501 = vst.msk [vmem:[%s500] sm:$0xf] %vm450, %v498
        %502 = vrot.lane.b32.xlu0 %v455, 72
        %v503 = vpop.permute.xlu0 %502
        %s505 = scalar_lea.vmem %s340, 12 [#allocation8]
        %506 = vst.msk [vmem:[%s505] sm:$0xf] %vm450, %v503
        %507 = vrot.lane.b32.xlu0 %v455, 40
        %v508 = vpop.permute.xlu0 %507
        %s510 = scalar_lea.vmem %s347, 12 [#allocation10]
        %511 = vst.msk [vmem:[%s510] sm:$0xf] %vm450, %v508
        %s512 = sand.u32 %s163, 1
        %s513 = scalar_lea.sflag [#allocation4], %s512
        %s514 = sand.u32 %s163, 1
        %s515 = smul.addr %s514, 16
        %s516 = scalar_lea.vmem [#allocation7], %s515
        %s517 = sand.u32 %s29, 1
        %s518 = scalar_lea.sflag [#allocation9], %s517
        %s519 = sand.u32 %s191, 1
        %s520 = smul.addr %s519, 16
        %s521 = scalar_lea.vmem [#allocation8], %s520
        %s522 = sand.u32 %s29, 1
        %s523 = scalar_lea.sflag [#allocation9], %s522
        %s524 = sand.u32 %s219, 1
        %s525 = smul.addr %s524, 16
        %s526 = scalar_lea.vmem [#allocation10], %s525
        // Predicated region
        $region49: #{tpu_custom_call.1} parent=39 // pred_check
          %p527 = pneg %p173
        $region50: #{tpu_custom_call.1} parent=39 // pred_check_branch
          %529 = sbr.rel (%p527) target = $region52
        $region51: #{tpu_custom_call.1} parent=39 // pred_region
          %s531 = ssub.s32 256, 256
          %532 = vsyncadd %s513, %s531
          %s533 = smul.addr %s33, 4
          %s534 = sadd.s32 %s34, %s533
          %s535 = smul.addr %s534, 64
          %s536 = scalar_lea.hbm %s5, %s535
          %s537 = sshll.u32 %s516, 4
          %s538 = int_to_ptr.vmem [resolvable:$true] %s537
          %543 = dma.vmem_to_hbm [thread:$0]  %s538, 256, %s536, %s513, 64, 64, 4
        $region52: #{tpu_custom_call.1} parent=39 // pred_fallthru
          _
        // Predicated region
        $region53: #{tpu_custom_call.1} parent=39 // pred_check
          %p544 = pneg %p201
        $region54: #{tpu_custom_call.1} parent=39 // pred_check_branch
          %546 = sbr.rel (%p544) target = $region56
        $region55: #{tpu_custom_call.1} parent=39 // pred_region
          %s548 = ssub.s32 256, 256
          %549 = vsyncadd %s518, %s548
          %s550 = smul.addr %s33, 4
          %s551 = sadd.s32 %s34, %s550
          %s552 = smul.addr %s551, 64
          %s553 = scalar_lea.hbm %s6, %s552
          %s554 = sshll.u32 %s521, 4
          %s555 = int_to_ptr.vmem [resolvable:$true] %s554
          %560 = dma.vmem_to_hbm [thread:$0]  %s555, 256, %s553, %s518, 64, 64, 4
        $region56: #{tpu_custom_call.1} parent=39 // pred_fallthru
          _
        // Predicated region
        $region57: #{tpu_custom_call.1} parent=39 // pred_check
          %p561 = pneg %p229
        $region58: #{tpu_custom_call.1} parent=39 // pred_check_branch
          %563 = sbr.rel (%p561) target = $region60
        $region59: #{tpu_custom_call.1} parent=39 // pred_region
          %s565 = ssub.s32 256, 256
          %566 = vsyncadd %s523, %s565
          %s567 = smul.addr %s33, 4
          %s568 = sadd.s32 %s34, %s567
          %s569 = smul.addr %s568, 64
          %s570 = scalar_lea.hbm %s7, %s569
          %s571 = sshll.u32 %s526, 4
          %s572 = int_to_ptr.vmem [resolvable:$true] %s571
          %577 = dma.vmem_to_hbm [thread:$0]  %s572, 256, %s570, %s523, 64, 64, 4
        $region60: #{tpu_custom_call.1} parent=39 // pred_fallthru
          _
      $region40: #{tpu_custom_call.1} parent=5 // pred_fallthru
        _
      %p578 = scmp.le.s32.totalorder 2, %s24
      // Predicated region
      $region61: #{tpu_custom_call.1} parent=5 // pred_check
        %p579 = pneg %p578
      $region62: #{tpu_custom_call.1} parent=5 // pred_check_branch
        %581 = sbr.rel (%p579) target = $region64
      $region63: #{tpu_custom_call.1} parent=5 // pred_region
        %s582 = ssub.s32 %s24, 2
        // Predicated region
        $region65: #{tpu_custom_call.1} parent=63 // pred_check
          %p583 = pneg %p179
        $region66: #{tpu_custom_call.1} parent=63 // pred_check_branch
          %585 = sbr.rel (%p583) target = $region68
        $region67: #{tpu_custom_call.1} parent=63 // pred_region
          %s586 = sand.u32 %s164, 1
          %s587 = scalar_lea.sflag [#allocation4], %s586
          %s588 = sand.u32 %s164, 1
          %s589 = smul.addr %s588, 16
          %s590 = scalar_lea.vmem [#allocation7], %s589
          %591 = dma.done %s587, 256
        $region68: #{tpu_custom_call.1} parent=63 // pred_fallthru
          _
        // Predicated region
        $region69: #{tpu_custom_call.1} parent=63 // pred_check
          %p592 = pneg %p207
        $region70: #{tpu_custom_call.1} parent=63 // pred_check_branch
          %594 = sbr.rel (%p592) target = $region72
        $region71: #{tpu_custom_call.1} parent=63 // pred_region
          %s595 = sand.u32 %s30, 1
          %s596 = scalar_lea.sflag [#allocation9], %s595
          %s597 = sand.u32 %s192, 1
          %s598 = smul.addr %s597, 16
          %s599 = scalar_lea.vmem [#allocation8], %s598
          %600 = dma.done %s596, 256
        $region72: #{tpu_custom_call.1} parent=63 // pred_fallthru
          _
        // Predicated region
        $region73: #{tpu_custom_call.1} parent=63 // pred_check
          %p601 = pneg %p235
        $region74: #{tpu_custom_call.1} parent=63 // pred_check_branch
          %603 = sbr.rel (%p601) target = $region76
        $region75: #{tpu_custom_call.1} parent=63 // pred_region
          %s604 = sand.u32 %s30, 1
          %s605 = scalar_lea.sflag [#allocation9], %s604
          %s606 = sand.u32 %s220, 1
          %s607 = smul.addr %s606, 16
          %s608 = scalar_lea.vmem [#allocation10], %s607
          %609 = dma.done %s605, 256
        $region76: #{tpu_custom_call.1} parent=63 // pred_fallthru
          _
      $region64: #{tpu_custom_call.1} parent=5 // pred_fallthru
        _
    $region6: #{tpu_custom_call.1} parent=1 // loop_footer
      %s28 = sadd.s32 1, %s24
    $region7: #{tpu_custom_call.1} parent=1 // loop_footer_branch
      %23 = sbr.rel target = $region3
    $region8: #{tpu_custom_call.1} parent=1 // loop_exit
      _
    %610 = vsyncpa [#allocation3], 1
    %s611 = scalar_lea.sflag [#allocation3], 1
    %612 = vsyncpa %s611, 1
    %613 = vsyncpa [#allocation6], 1
    %614 = vsyncpa [#allocation4], 1
    %s615 = scalar_lea.sflag [#allocation4], 1
    %616 = vsyncpa %s615, 1
    %617 = vsyncpa [#allocation9], 1
    %s618 = scalar_lea.sflag [#allocation9], 1
    %619 = vsyncpa %s618, 1

</llo_original>
